<compile_context>
chip_gen: v7x
topology: tpu7x:2x2x1
jax: 0.10.0
libtpu: 0.0.40
codegen_flags: <defaults>
</compile_context>

<pallas_src>
import functools

import jax
import jax.numpy as jnp
from jax.experimental import pallas as pl
from jax.experimental.pallas import tpu as pltpu


def _round_up(x, m):
    return ((x + m - 1) // m) * m


def _biaffine_kernel(h_ref, d_ref,
                     w1t_ref, b1_ref,
                     w2t_ref, b2_ref,
                     wb_ref,
                     wlh_ref, wld_ref, bl_ref,
                     out_ref, *, out_channels, o_pad):
    f32 = jnp.float32
    cdt = wb_ref.dtype  # MXU operand dtype (bf16 by default, f32 exact path)

    # Row projections: h' = h @ W1^T + b1 ; d' = d @ W2^T + b2
    # (compute-dtype operands, f32 accumulation; bias adds in f32).
    hp = jnp.dot(h_ref[...], w1t_ref[...], preferred_element_type=f32) + b1_ref[...]
    dp = jnp.dot(d_ref[...], w2t_ref[...], preferred_element_type=f32) + b2_ref[...]
    # TODO(synk): dropout is identity here (eval-mode semantics); train-mode
    # stochastic masking is not implemented.

    hp_c = hp.astype(cdt)
    dp_c = dp.astype(cdt)

    # Bilinear term: one (TILE_N, D_pad) @ (D_pad, D_pad) MXU matmul per output
    # channel, then dp weighting + segmented lane reduction in f32 on VPU/XLU.
    # (No selector matmul, no bf16 rounding of the products before reduction.)
    rows = hp.shape[0]
    cols = []
    for o in range(out_channels):
        t_o = jnp.dot(hp_c, wb_ref[o], preferred_element_type=f32)   # (TN, D_pad) f32
        cols.append(jnp.sum(t_o * dp, axis=-1, keepdims=True))       # (TN, 1) f32
    if o_pad > out_channels:
        cols.append(jnp.zeros((rows, o_pad - out_channels), f32))
    s1 = jnp.concatenate(cols, axis=-1)                               # (TN, O_pad)

    # Linear on concat([h', d']), split into the h-half and d-half, padded to a
    # lane-dense O_pad width.  The bilinear bias is folded into bl_ref (padded
    # lanes are zero, so padded output lanes stay zero).
    s2 = (jnp.dot(hp_c, wlh_ref[...], preferred_element_type=f32)
          + jnp.dot(dp_c, wld_ref[...], preferred_element_type=f32)
          + bl_ref[...])                                              # (TN, O_pad)

    out_ref[...] = (s1 + s2).astype(out_ref.dtype)


def prepare_params(params, *, compute_dtype=jnp.bfloat16):
    """One-time weight preprocessing (transpose / pad / cast). Call once and
    reuse the result across forward calls."""
    f32 = jnp.float32
    dim = params["w1"].shape[0]
    out_channels = params["bilinear_b"].shape[0]
    d_pad = _round_up(dim, 128)
    o_pad = _round_up(out_channels, 128)

    def pad2(x, rows, cols):
        x = jnp.asarray(x, f32)
        return jnp.pad(x, ((0, rows - x.shape[0]), (0, cols - x.shape[1])))

    # Projection weights, pre-transposed so the kernel does row @ mat.
    w1t = pad2(params["w1"].T, d_pad, d_pad).astype(compute_dtype)
    b1 = pad2(params["b1"].reshape(1, dim), 1, d_pad)                  # f32
    w2t = pad2(params["w2"].T, d_pad, d_pad).astype(compute_dtype)
    b2 = pad2(params["b2"].reshape(1, dim), 1, d_pad)                  # f32

    # Bilinear weight kept as (O, D_pad, D_pad); kernel indexes wb_ref[o].
    wb = jnp.asarray(params["bilinear_w"], f32)                        # (O, D, D)
    wb3 = jnp.pad(wb, ((0, 0), (0, d_pad - dim), (0, d_pad - dim)))
    wb3 = wb3.astype(compute_dtype)

    # Linear-on-concat weights split into h/d halves, padded lane-dense.
    lw = jnp.asarray(params["linear_w"], f32)                          # (O, 2D)
    wlh = pad2(lw[:, :dim].T, d_pad, o_pad).astype(compute_dtype)
    wld = pad2(lw[:, dim:].T, d_pad, o_pad).astype(compute_dtype)
    # Fold the bilinear bias into the linear bias (both added once per row).
    bl = pad2((params["linear_b"] + params["bilinear_b"]).reshape(1, out_channels),
              1, o_pad)                                                # f32

    return {
        "dim": dim, "out_channels": out_channels,
        "d_pad": d_pad, "o_pad": o_pad,
        "compute_dtype": jnp.dtype(compute_dtype),
        "w1t": w1t, "b1": b1, "w2t": w2t, "b2": b2,
        "wb3": wb3, "wlh": wlh, "wld": wld, "bl": bl,
    }


def biaffine_attention(h, d, prepared, *, tile_n=256,
                       out_dtype=jnp.float32,
                       vmem_limit_bytes=None,
                       single_buffer_weights=True):
    """h, d: (B, S, dim) float32. Returns (B, S, out_channels) in out_dtype.

    out_dtype=jnp.bfloat16 halves the lane-dense HBM writeback (useful when
    O << 128 and the kernel is memory-bound); f32 is the default for parity.
    """
    B, S, D = h.shape
    assert d.shape == h.shape
    assert D == prepared["dim"]
    O = prepared["out_channels"]
    d_pad, o_pad = prepared["d_pad"], prepared["o_pad"]
    cdt = prepared["compute_dtype"]
    f32 = jnp.float32

    N = B * S
    # Clamp the row tile to the (8-rounded) row count so tiny inputs don't pay
    # for a full 256-row padded tile; sweep larger tile_n (384/512) on
    # v5e/v6e when D_pad <= 512.
    tile_n = max(8, min(tile_n, _round_up(N, 8)))
    n_pad = _round_up(N, tile_n)

    def to_rows(x):
        x2 = x.reshape(N, D)
        if n_pad != N or d_pad != D:  # skip the pad copy when already aligned
            x2 = jnp.pad(x2, ((0, n_pad - N), (0, d_pad - D)))
        return x2.astype(cdt)

    h2, d2 = to_rows(h), to_rows(d)
    w1t, b1 = prepared["w1t"], prepared["b1"]
    w2t, b2 = prepared["w2t"], prepared["b2"]
    wb3 = prepared["wb3"]
    wlh, wld, bl = prepared["wlh"], prepared["wld"], prepared["bl"]

    args = (h2, d2, w1t, b1, w2t, b2, wb3, wlh, wld, bl)
    kernel = functools.partial(_biaffine_kernel, out_channels=O, o_pad=o_pad)

    # ---- VMEM budget: size the scoped limit from the real footprint. ----
    csize = jnp.dtype(cdt).itemsize
    osize = jnp.dtype(out_dtype).itemsize
    weight_bytes = sum(int(a.size) * a.dtype.itemsize
                       for a in (w1t, b1, w2t, b2, wb3, wlh, wld, bl))
    io_bytes = 2 * (2 * tile_n * d_pad * csize)          # h/d tiles, double buffered
    out_bytes = 2 * tile_n * o_pad * osize               # output tile, double buffered
    interm_bytes = (4 * tile_n * d_pad * 4               # hp, dp, t_o (+ headroom), f32
                    + 2 * tile_n * d_pad * csize         # hp_c, dp_c
                    + 2 * tile_n * o_pad * 4)            # s1, s2
    est = 2 * weight_bytes + io_bytes + out_bytes + interm_bytes  # weights x2 = worst case
    if vmem_limit_bytes is None:
        try:
            cap = int(0.9 * pltpu.get_tpu_info().vmem_capacity_bytes)
        except Exception:  # info not queryable -> safe cap on every generation
            cap = 64 << 20
        vmem_limit_bytes = min(max(2 * est + (4 << 20), 16 << 20), cap)

    flops = (2 * 2 * n_pad * d_pad * d_pad               # two projections
             + O * 2 * n_pad * d_pad * d_pad             # per-channel bilinear matmuls
             + 3 * n_pad * O * d_pad                     # dp weighting + reduction (VPU/XLU)
             + 2 * 2 * n_pad * d_pad * o_pad)            # concat-linear halves
    bytes_accessed = (sum(int(a.size) * a.dtype.itemsize for a in args)
                      + n_pad * o_pad * osize)
    cost = pl.CostEstimate(flops=int(flops), transcendentals=0,
                           bytes_accessed=int(bytes_accessed))

    def build(use_single_buffer):
        def wspec(shape):
            zero = (0,) * len(shape)
            kwargs = {}
            if use_single_buffer:
                # Grid-invariant operand: the default double buffer is a dead
                # copy; a single buffer halves the weight VMEM footprint.
                kwargs["pipeline_mode"] = pl.Buffered(1)
            return pl.BlockSpec(shape, lambda i, z=zero: z, **kwargs)

        return pl.pallas_call(
            kernel,
            out_shape=jax.ShapeDtypeStruct((n_pad, o_pad), out_dtype),
            grid_spec=pltpu.PrefetchScalarGridSpec(
                num_scalar_prefetch=0,
                grid=(n_pad // tile_n,),
                in_specs=[
                    pl.BlockSpec((tile_n, d_pad), lambda i: (i, 0)),   # h rows
                    pl.BlockSpec((tile_n, d_pad), lambda i: (i, 0)),   # d rows
                    wspec((d_pad, d_pad)),                             # W1^T
                    wspec((1, d_pad)),                                 # b1
                    wspec((d_pad, d_pad)),                             # W2^T
                    wspec((1, d_pad)),                                 # b2
                    wspec((O, d_pad, d_pad)),                          # bilinear W
                    wspec((d_pad, o_pad)),                             # linear W (h half)^T
                    wspec((d_pad, o_pad)),                             # linear W (d half)^T
                    wspec((1, o_pad)),                                 # linear+bilinear bias
                ],
                out_specs=pl.BlockSpec((tile_n, o_pad), lambda i: (i, 0)),
            ),
            compiler_params=pltpu.CompilerParams(
                dimension_semantics=("parallel",),
                vmem_limit_bytes=int(vmem_limit_bytes)),
            cost_estimate=cost,
        )

    if single_buffer_weights:
        try:
            out = build(True)(*args)
        except Exception:
            # Graceful fallback for JAX versions where pl.Buffered(1) is not
            # accepted on pallas_call in_specs (costs one extra weight buffer).
            out = build(False)(*args)
    else:
        out = build(False)(*args)

    return out[:N, :O].reshape(B, S, O)


def _reference(h, d, params):
    hp = h @ params["w1"].T + params["b1"]
    dp = d @ params["w2"].T + params["b2"]
    s1 = jnp.einsum("bsi,oij,bsj->bso", hp, params["bilinear_w"], dp) \
         + params["bilinear_b"]
    cat = jnp.concatenate([hp, dp], axis=-1)
    s2 = cat @ params["linear_w"].T + params["linear_b"]
    return s1 + s2


def _init_params(key, dim, out_channels):
    ks = jax.random.split(key, 8)
    scale = 0.1
    return {
        "w1": scale * jax.random.normal(ks[0], (dim, dim), jnp.float32),
        "b1": scale * jax.random.normal(ks[1], (dim,), jnp.float32),
        "w2": scale * jax.random.normal(ks[2], (dim, dim), jnp.float32),
        "b2": scale * jax.random.normal(ks[3], (dim,), jnp.float32),
        "bilinear_w": scale * jax.random.normal(
            ks[4], (out_channels, dim, dim), jnp.float32),
        "bilinear_b": scale * jax.random.normal(
            ks[5], (out_channels,), jnp.float32),
        "linear_w": scale * jax.random.normal(
            ks[6], (out_channels, 2 * dim), jnp.float32),
        "linear_b": scale * jax.random.normal(
            ks[7], (out_channels,), jnp.float32),
    }


if __name__ == "__main__":
    B, S, DIM, OUT = 2, 8, 32, 4
    key = jax.random.PRNGKey(0)
    kh, kd, kp = jax.random.split(key, 3)
    h = jax.random.normal(kh, (B, S, DIM), jnp.float32)
    d = jax.random.normal(kd, (B, S, DIM), jnp.float32)
    params = _init_params(kp, DIM, OUT)

    # One-time weight preprocessing (hoisted out of the per-call path).
    prep_bf16 = prepare_params(params, compute_dtype=jnp.bfloat16)
    prep_f32 = prepare_params(params, compute_dtype=jnp.float32)

    # Default path: bf16 MXU operands, f32 accumulation + f32 reduction.
    out = jax.block_until_ready(biaffine_attention(h, d, prep_bf16))
    # Exact f32 path for a strict numerical check.
    out_f32 = jax.block_until_ready(biaffine_attention(h, d, prep_f32))

    ref = _reference(h, d, params)
    assert out.shape == (B, S, OUT)
    assert jnp.allclose(out_f32, ref, atol=1e-4, rtol=1e-4), \
        "f32 kernel mismatch vs reference"
    assert jnp.allclose(out, ref, atol=1e-1, rtol=1e-1), \
        "bf16 kernel mismatch vs reference"
    print("KERNEL_OK")
</pallas_src>

<mosaic_0001>
module attributes {stable_mosaic.version = 11 : i64} {
  func.func @_biaffine_kernel(%arg0: i32, %arg1: memref<16x128xbf16, #tpu.memory_space<vmem>>, %arg2: memref<16x128xbf16, #tpu.memory_space<vmem>>, %arg3: memref<128x128xbf16, #tpu.memory_space<vmem>>, %arg4: memref<1x128xf32, #tpu.memory_space<vmem>>, %arg5: memref<128x128xbf16, #tpu.memory_space<vmem>>, %arg6: memref<1x128xf32, #tpu.memory_space<vmem>>, %arg7: memref<4x128x128xbf16, #tpu.memory_space<vmem>>, %arg8: memref<128x128xbf16, #tpu.memory_space<vmem>>, %arg9: memref<128x128xbf16, #tpu.memory_space<vmem>>, %arg10: memref<1x128xf32, #tpu.memory_space<vmem>>, %arg11: memref<16x128xf32, #tpu.memory_space<vmem>>) attributes {dimension_semantics = [#tpu.dimension_semantics<parallel>], iteration_bounds = array<i64: 1>, scalar_prefetch = 0 : i64, scratch_operands = 0 : i64, tpu.core_type = #tpu.core_type<tc>, window_params = [{transform_indices = @transform_0, window_bounds = array<i64: 16, 128>}, {transform_indices = @transform_1, window_bounds = array<i64: 16, 128>}, {pipeline_mode = #tpu.pipeline_mode<synchronous>, transform_indices = @transform_2, window_bounds = array<i64: 128, 128>}, {pipeline_mode = #tpu.pipeline_mode<synchronous>, transform_indices = @transform_3, window_bounds = array<i64: 1, 128>}, {pipeline_mode = #tpu.pipeline_mode<synchronous>, transform_indices = @transform_4, window_bounds = array<i64: 128, 128>}, {pipeline_mode = #tpu.pipeline_mode<synchronous>, transform_indices = @transform_5, window_bounds = array<i64: 1, 128>}, {pipeline_mode = #tpu.pipeline_mode<synchronous>, transform_indices = @transform_6, window_bounds = array<i64: 4, 128, 128>}, {pipeline_mode = #tpu.pipeline_mode<synchronous>, transform_indices = @transform_7, window_bounds = array<i64: 128, 128>}, {pipeline_mode = #tpu.pipeline_mode<synchronous>, transform_indices = @transform_8, window_bounds = array<i64: 128, 128>}, {pipeline_mode = #tpu.pipeline_mode<synchronous>, transform_indices = @transform_9, window_bounds = array<i64: 1, 128>}, {transform_indices = @transform_10, window_bounds = array<i64: 16, 128>}]} {
    %c0 = arith.constant 0 : index
    %c0_0 = arith.constant 0 : index
    %0 = vector.load %arg1[%c0, %c0_0] : memref<16x128xbf16, #tpu.memory_space<vmem>>, vector<16x128xbf16>
    %c0_1 = arith.constant 0 : index
    %c0_2 = arith.constant 0 : index
    %1 = vector.load %arg3[%c0_1, %c0_2] : memref<128x128xbf16, #tpu.memory_space<vmem>>, vector<128x128xbf16>
    %cst = arith.constant dense<0.000000e+00> : vector<16x128xf32>
    %2 = tpu.matmul %0, %1, %cst {dimension_numbers = #tpu.dot_dimension_numbers<[1], [0], [0], [1], [0, 0, 1, 1], [], []>} : vector<16x128xbf16>, vector<128x128xbf16>, vector<16x128xf32> -> vector<16x128xf32>
    %c0_3 = arith.constant 0 : index
    %c0_4 = arith.constant 0 : index
    %3 = vector.load %arg4[%c0_3, %c0_4] : memref<1x128xf32, #tpu.memory_space<vmem>>, vector<1x128xf32>
    %4 = vector.broadcast %3 : vector<1x128xf32> to vector<16x128xf32>
    %5 = arith.addf %2, %4 : vector<16x128xf32>
    %c0_5 = arith.constant 0 : index
    %c0_6 = arith.constant 0 : index
    %6 = vector.load %arg2[%c0_5, %c0_6] : memref<16x128xbf16, #tpu.memory_space<vmem>>, vector<16x128xbf16>
    %c0_7 = arith.constant 0 : index
    %c0_8 = arith.constant 0 : index
    %7 = vector.load %arg5[%c0_7, %c0_8] : memref<128x128xbf16, #tpu.memory_space<vmem>>, vector<128x128xbf16>
    %cst_9 = arith.constant dense<0.000000e+00> : vector<16x128xf32>
    %8 = tpu.matmul %6, %7, %cst_9 {dimension_numbers = #tpu.dot_dimension_numbers<[1], [0], [0], [1], [0, 0, 1, 1], [], []>} : vector<16x128xbf16>, vector<128x128xbf16>, vector<16x128xf32> -> vector<16x128xf32>
    %c0_10 = arith.constant 0 : index
    %c0_11 = arith.constant 0 : index
    %9 = vector.load %arg6[%c0_10, %c0_11] : memref<1x128xf32, #tpu.memory_space<vmem>>, vector<1x128xf32>
    %10 = vector.broadcast %9 : vector<1x128xf32> to vector<16x128xf32>
    %11 = arith.addf %8, %10 : vector<16x128xf32>
    %12 = arith.truncf %5 : vector<16x128xf32> to vector<16x128xbf16>
    %13 = arith.truncf %11 : vector<16x128xf32> to vector<16x128xbf16>
    %c0_12 = arith.constant 0 : index
    %c0_13 = arith.constant 0 : index
    %c0_14 = arith.constant 0 : index
    %14 = vector.load %arg7[%c0_12, %c0_13, %c0_14] : memref<4x128x128xbf16, #tpu.memory_space<vmem>>, vector<1x128x128xbf16>
    %15 = vector.shape_cast %14 : vector<1x128x128xbf16> to vector<128x128xbf16>
    %cst_15 = arith.constant dense<0.000000e+00> : vector<16x128xf32>
    %16 = tpu.matmul %12, %15, %cst_15 {dimension_numbers = #tpu.dot_dimension_numbers<[1], [0], [0], [1], [0, 0, 1, 1], [], []>} : vector<16x128xbf16>, vector<128x128xbf16>, vector<16x128xf32> -> vector<16x128xf32>
    %17 = arith.mulf %16, %11 : vector<16x128xf32>
    %cst_16 = arith.constant dense<0.000000e+00> : vector<16xf32>
    %18 = vector.multi_reduction <add>, %17, %cst_16 [1] : vector<16x128xf32> to vector<16xf32>
    %19 = vector.shape_cast %18 : vector<16xf32> to vector<16x1xf32>
    %c1 = arith.constant 1 : index
    %c0_17 = arith.constant 0 : index
    %c0_18 = arith.constant 0 : index
    %20 = vector.load %arg7[%c1, %c0_17, %c0_18] : memref<4x128x128xbf16, #tpu.memory_space<vmem>>, vector<1x128x128xbf16>
    %21 = vector.shape_cast %20 : vector<1x128x128xbf16> to vector<128x128xbf16>
    %cst_19 = arith.constant dense<0.000000e+00> : vector<16x128xf32>
    %22 = tpu.matmul %12, %21, %cst_19 {dimension_numbers = #tpu.dot_dimension_numbers<[1], [0], [0], [1], [0, 0, 1, 1], [], []>} : vector<16x128xbf16>, vector<128x128xbf16>, vector<16x128xf32> -> vector<16x128xf32>
    %23 = arith.mulf %22, %11 : vector<16x128xf32>
    %cst_20 = arith.constant dense<0.000000e+00> : vector<16xf32>
    %24 = vector.multi_reduction <add>, %23, %cst_20 [1] : vector<16x128xf32> to vector<16xf32>
    %25 = vector.shape_cast %24 : vector<16xf32> to vector<16x1xf32>
    %c2 = arith.constant 2 : index
    %c0_21 = arith.constant 0 : index
    %c0_22 = arith.constant 0 : index
    %26 = vector.load %arg7[%c2, %c0_21, %c0_22] : memref<4x128x128xbf16, #tpu.memory_space<vmem>>, vector<1x128x128xbf16>
    %27 = vector.shape_cast %26 : vector<1x128x128xbf16> to vector<128x128xbf16>
    %cst_23 = arith.constant dense<0.000000e+00> : vector<16x128xf32>
    %28 = tpu.matmul %12, %27, %cst_23 {dimension_numbers = #tpu.dot_dimension_numbers<[1], [0], [0], [1], [0, 0, 1, 1], [], []>} : vector<16x128xbf16>, vector<128x128xbf16>, vector<16x128xf32> -> vector<16x128xf32>
    %29 = arith.mulf %28, %11 : vector<16x128xf32>
    %cst_24 = arith.constant dense<0.000000e+00> : vector<16xf32>
    %30 = vector.multi_reduction <add>, %29, %cst_24 [1] : vector<16x128xf32> to vector<16xf32>
    %31 = vector.shape_cast %30 : vector<16xf32> to vector<16x1xf32>
    %c3 = arith.constant 3 : index
    %c0_25 = arith.constant 0 : index
    %c0_26 = arith.constant 0 : index
    %32 = vector.load %arg7[%c3, %c0_25, %c0_26] : memref<4x128x128xbf16, #tpu.memory_space<vmem>>, vector<1x128x128xbf16>
    %33 = vector.shape_cast %32 : vector<1x128x128xbf16> to vector<128x128xbf16>
    %cst_27 = arith.constant dense<0.000000e+00> : vector<16x128xf32>
    %34 = tpu.matmul %12, %33, %cst_27 {dimension_numbers = #tpu.dot_dimension_numbers<[1], [0], [0], [1], [0, 0, 1, 1], [], []>} : vector<16x128xbf16>, vector<128x128xbf16>, vector<16x128xf32> -> vector<16x128xf32>
    %35 = arith.mulf %34, %11 : vector<16x128xf32>
    %cst_28 = arith.constant dense<0.000000e+00> : vector<16xf32>
    %36 = vector.multi_reduction <add>, %35, %cst_28 [1] : vector<16x128xf32> to vector<16xf32>
    %37 = vector.shape_cast %36 : vector<16xf32> to vector<16x1xf32>
    %cst_29 = arith.constant 0.000000e+00 : f32
    %38 = vector.broadcast %cst_29 : f32 to vector<16x124xf32>
    %39 = tpu.concatenate %19, %25, %31, %37, %38 in 1 : vector<16x1xf32>, vector<16x1xf32>, vector<16x1xf32>, vector<16x1xf32>, vector<16x124xf32> -> vector<16x128xf32>
    %c0_30 = arith.constant 0 : index
    %c0_31 = arith.constant 0 : index
    %40 = vector.load %arg8[%c0_30, %c0_31] : memref<128x128xbf16, #tpu.memory_space<vmem>>, vector<128x128xbf16>
    %cst_32 = arith.constant dense<0.000000e+00> : vector<16x128xf32>
    %41 = tpu.matmul %12, %40, %cst_32 {dimension_numbers = #tpu.dot_dimension_numbers<[1], [0], [0], [1], [0, 0, 1, 1], [], []>} : vector<16x128xbf16>, vector<128x128xbf16>, vector<16x128xf32> -> vector<16x128xf32>
    %c0_33 = arith.constant 0 : index
    %c0_34 = arith.constant 0 : index
    %42 = vector.load %arg9[%c0_33, %c0_34] : memref<128x128xbf16, #tpu.memory_space<vmem>>, vector<128x128xbf16>
    %cst_35 = arith.constant dense<0.000000e+00> : vector<16x128xf32>
    %43 = tpu.matmul %13, %42, %cst_35 {dimension_numbers = #tpu.dot_dimension_numbers<[1], [0], [0], [1], [0, 0, 1, 1], [], []>} : vector<16x128xbf16>, vector<128x128xbf16>, vector<16x128xf32> -> vector<16x128xf32>
    %44 = arith.addf %41, %43 : vector<16x128xf32>
    %c0_36 = arith.constant 0 : index
    %c0_37 = arith.constant 0 : index
    %45 = vector.load %arg10[%c0_36, %c0_37] : memref<1x128xf32, #tpu.memory_space<vmem>>, vector<1x128xf32>
    %46 = vector.broadcast %45 : vector<1x128xf32> to vector<16x128xf32>
    %47 = arith.addf %44, %46 : vector<16x128xf32>
    %48 = arith.addf %39, %47 : vector<16x128xf32>
    %c0_38 = arith.constant 0 : index
    %c0_39 = arith.constant 0 : index
    %49 = vector.load %arg11[%c0_38, %c0_39] : memref<16x128xf32, #tpu.memory_space<vmem>>, vector<16x128xf32>
    tpu.vector_store %arg11[%c0_38, %c0_39], %48 {strides = array<i32>} : memref<16x128xf32, #tpu.memory_space<vmem>>, vector<16x128xf32>,
    return
  }
  func.func @transform_0(%arg0: i32) -> (i32, i32) {
    %c0_i32 = arith.constant 0 : i32
    %c0_i32_0 = arith.constant 0 : i32
    return %arg0, %c0_i32 : i32, i32
  }
  func.func @transform_1(%arg0: i32) -> (i32, i32) {
    %c0_i32 = arith.constant 0 : i32
    %c0_i32_0 = arith.constant 0 : i32
    return %arg0, %c0_i32 : i32, i32
  }
  func.func @transform_2(%arg0: i32) -> (i32, i32) {
    %c0_i32 = arith.constant 0 : i32
    %c0_i32_0 = arith.constant 0 : i32
    %c0_i32_1 = arith.constant 0 : i32
    return %c0_i32, %c0_i32_0 : i32, i32
  }
  func.func @transform_3(%arg0: i32) -> (i32, i32) {
    %c0_i32 = arith.constant 0 : i32
    %c0_i32_0 = arith.constant 0 : i32
    %c0_i32_1 = arith.constant 0 : i32
    return %c0_i32, %c0_i32_0 : i32, i32
  }
  func.func @transform_4(%arg0: i32) -> (i32, i32) {
    %c0_i32 = arith.constant 0 : i32
    %c0_i32_0 = arith.constant 0 : i32
    %c0_i32_1 = arith.constant 0 : i32
    return %c0_i32, %c0_i32_0 : i32, i32
  }
  func.func @transform_5(%arg0: i32) -> (i32, i32) {
    %c0_i32 = arith.constant 0 : i32
    %c0_i32_0 = arith.constant 0 : i32
    %c0_i32_1 = arith.constant 0 : i32
    return %c0_i32, %c0_i32_0 : i32, i32
  }
  func.func @transform_6(%arg0: i32) -> (i32, i32, i32) {
    %c0_i32 = arith.constant 0 : i32
    %c0_i32_0 = arith.constant 0 : i32
    %c0_i32_1 = arith.constant 0 : i32
    %c0_i32_2 = arith.constant 0 : i32
    return %c0_i32, %c0_i32_0, %c0_i32_1 : i32, i32, i32
  }
  func.func @transform_7(%arg0: i32) -> (i32, i32) {
    %c0_i32 = arith.constant 0 : i32
    %c0_i32_0 = arith.constant 0 : i32
    %c0_i32_1 = arith.constant 0 : i32
    return %c0_i32, %c0_i32_0 : i32, i32
  }
  func.func @transform_8(%arg0: i32) -> (i32, i32) {
    %c0_i32 = arith.constant 0 : i32
    %c0_i32_0 = arith.constant 0 : i32
    %c0_i32_1 = arith.constant 0 : i32
    return %c0_i32, %c0_i32_0 : i32, i32
  }
  func.func @transform_9(%arg0: i32) -> (i32, i32) {
    %c0_i32 = arith.constant 0 : i32
    %c0_i32_0 = arith.constant 0 : i32
    %c0_i32_1 = arith.constant 0 : i32
    return %c0_i32, %c0_i32_0 : i32, i32
  }
  func.func @transform_10(%arg0: i32) -> (i32, i32) {
    %c0_i32 = arith.constant 0 : i32
    %c0_i32_0 = arith.constant 0 : i32
    return %arg0, %c0_i32 : i32, i32
  }
}

module attributes {stable_mosaic.version = 11 : i64} {
  func.func @_biaffine_kernel(%arg0: i32, %arg1: memref<16x128xbf16, #tpu.memory_space<vmem>>, %arg2: memref<16x128xbf16, #tpu.memory_space<vmem>>, %arg3: memref<128x128xbf16, #tpu.memory_space<vmem>>, %arg4: memref<1x128xf32, #tpu.memory_space<vmem>>, %arg5: memref<128x128xbf16, #tpu.memory_space<vmem>>, %arg6: memref<1x128xf32, #tpu.memory_space<vmem>>, %arg7: memref<4x128x128xbf16, #tpu.memory_space<vmem>>, %arg8: memref<128x128xbf16, #tpu.memory_space<vmem>>, %arg9: memref<128x128xbf16, #tpu.memory_space<vmem>>, %arg10: memref<1x128xf32, #tpu.memory_space<vmem>>, %arg11: memref<16x128xf32, #tpu.memory_space<vmem>>) attributes {dimension_semantics = [#tpu.dimension_semantics<parallel>], iteration_bounds = array<i64: 1>, scalar_prefetch = 0 : i64, scratch_operands = 0 : i64, tpu.core_type = #tpu.core_type<tc>, window_params = [{transform_indices = @transform_0, window_bounds = array<i64: 16, 128>}, {transform_indices = @transform_1, window_bounds = array<i64: 16, 128>}, {pipeline_mode = #tpu.pipeline_mode<synchronous>, transform_indices = @transform_2, window_bounds = array<i64: 128, 128>}, {pipeline_mode = #tpu.pipeline_mode<synchronous>, transform_indices = @transform_3, window_bounds = array<i64: 1, 128>}, {pipeline_mode = #tpu.pipeline_mode<synchronous>, transform_indices = @transform_4, window_bounds = array<i64: 128, 128>}, {pipeline_mode = #tpu.pipeline_mode<synchronous>, transform_indices = @transform_5, window_bounds = array<i64: 1, 128>}, {pipeline_mode = #tpu.pipeline_mode<synchronous>, transform_indices = @transform_6, window_bounds = array<i64: 4, 128, 128>}, {pipeline_mode = #tpu.pipeline_mode<synchronous>, transform_indices = @transform_7, window_bounds = array<i64: 128, 128>}, {pipeline_mode = #tpu.pipeline_mode<synchronous>, transform_indices = @transform_8, window_bounds = array<i64: 128, 128>}, {pipeline_mode = #tpu.pipeline_mode<synchronous>, transform_indices = @transform_9, window_bounds = array<i64: 1, 128>}, {transform_indices = @transform_10, window_bounds = array<i64: 16, 128>}]} {
    %c0 = arith.constant 0 : index
    %c0_0 = arith.constant 0 : index
    %0 = vector.load %arg1[%c0, %c0_0] : memref<16x128xbf16, #tpu.memory_space<vmem>>, vector<16x128xbf16>
    %c0_1 = arith.constant 0 : index
    %c0_2 = arith.constant 0 : index
    %1 = vector.load %arg3[%c0_1, %c0_2] : memref<128x128xbf16, #tpu.memory_space<vmem>>, vector<128x128xbf16>
    %cst = arith.constant dense<0.000000e+00> : vector<16x128xf32>
    %2 = tpu.matmul %0, %1, %cst {dimension_numbers = #tpu.dot_dimension_numbers<[1], [0], [0], [1], [0, 0, 1, 1], [], []>} : vector<16x128xbf16>, vector<128x128xbf16>, vector<16x128xf32> -> vector<16x128xf32>
    %c0_3 = arith.constant 0 : index
    %c0_4 = arith.constant 0 : index
    %3 = vector.load %arg4[%c0_3, %c0_4] : memref<1x128xf32, #tpu.memory_space<vmem>>, vector<1x128xf32>
    %4 = vector.broadcast %3 : vector<1x128xf32> to vector<16x128xf32>
    %5 = arith.addf %2, %4 : vector<16x128xf32>
    %c0_5 = arith.constant 0 : index
    %c0_6 = arith.constant 0 : index
    %6 = vector.load %arg2[%c0_5, %c0_6] : memref<16x128xbf16, #tpu.memory_space<vmem>>, vector<16x128xbf16>
    %c0_7 = arith.constant 0 : index
    %c0_8 = arith.constant 0 : index
    %7 = vector.load %arg5[%c0_7, %c0_8] : memref<128x128xbf16, #tpu.memory_space<vmem>>, vector<128x128xbf16>
    %cst_9 = arith.constant dense<0.000000e+00> : vector<16x128xf32>
    %8 = tpu.matmul %6, %7, %cst_9 {dimension_numbers = #tpu.dot_dimension_numbers<[1], [0], [0], [1], [0, 0, 1, 1], [], []>} : vector<16x128xbf16>, vector<128x128xbf16>, vector<16x128xf32> -> vector<16x128xf32>
    %c0_10 = arith.constant 0 : index
    %c0_11 = arith.constant 0 : index
    %9 = vector.load %arg6[%c0_10, %c0_11] : memref<1x128xf32, #tpu.memory_space<vmem>>, vector<1x128xf32>
    %10 = vector.broadcast %9 : vector<1x128xf32> to vector<16x128xf32>
    %11 = arith.addf %8, %10 : vector<16x128xf32>
    %12 = arith.truncf %5 : vector<16x128xf32> to vector<16x128xbf16>
    %13 = arith.truncf %11 : vector<16x128xf32> to vector<16x128xbf16>
    %c0_12 = arith.constant 0 : index
    %c0_13 = arith.constant 0 : index
    %c0_14 = arith.constant 0 : index
    %14 = vector.load %arg7[%c0_12, %c0_13, %c0_14] : memref<4x128x128xbf16, #tpu.memory_space<vmem>>, vector<1x128x128xbf16>
    %15 = vector.shape_cast %14 : vector<1x128x128xbf16> to vector<128x128xbf16>
    %cst_15 = arith.constant dense<0.000000e+00> : vector<16x128xf32>
    %16 = tpu.matmul %12, %15, %cst_15 {dimension_numbers = #tpu.dot_dimension_numbers<[1], [0], [0], [1], [0, 0, 1, 1], [], []>} : vector<16x128xbf16>, vector<128x128xbf16>, vector<16x128xf32> -> vector<16x128xf32>
    %17 = arith.mulf %16, %11 : vector<16x128xf32>
    %cst_16 = arith.constant dense<0.000000e+00> : vector<16xf32>
    %18 = vector.multi_reduction <add>, %17, %cst_16 [1] : vector<16x128xf32> to vector<16xf32>
    %19 = vector.shape_cast %18 : vector<16xf32> to vector<16x1xf32>
    %c1 = arith.constant 1 : index
    %c0_17 = arith.constant 0 : index
    %c0_18 = arith.constant 0 : index
    %20 = vector.load %arg7[%c1, %c0_17, %c0_18] : memref<4x128x128xbf16, #tpu.memory_space<vmem>>, vector<1x128x128xbf16>
    %21 = vector.shape_cast %20 : vector<1x128x128xbf16> to vector<128x128xbf16>
    %cst_19 = arith.constant dense<0.000000e+00> : vector<16x128xf32>
    %22 = tpu.matmul %12, %21, %cst_19 {dimension_numbers = #tpu.dot_dimension_numbers<[1], [0], [0], [1], [0, 0, 1, 1], [], []>} : vector<16x128xbf16>, vector<128x128xbf16>, vector<16x128xf32> -> vector<16x128xf32>
    %23 = arith.mulf %22, %11 : vector<16x128xf32>
    %cst_20 = arith.constant dense<0.000000e+00> : vector<16xf32>
    %24 = vector.multi_reduction <add>, %23, %cst_20 [1] : vector<16x128xf32> to vector<16xf32>
    %25 = vector.shape_cast %24 : vector<16xf32> to vector<16x1xf32>
    %c2 = arith.constant 2 : index
    %c0_21 = arith.constant 0 : index
    %c0_22 = arith.constant 0 : index
    %26 = vector.load %arg7[%c2, %c0_21, %c0_22] : memref<4x128x128xbf16, #tpu.memory_space<vmem>>, vector<1x128x128xbf16>
    %27 = vector.shape_cast %26 : vector<1x128x128xbf16> to vector<128x128xbf16>
    %cst_23 = arith.constant dense<0.000000e+00> : vector<16x128xf32>
    %28 = tpu.matmul %12, %27, %cst_23 {dimension_numbers = #tpu.dot_dimension_numbers<[1], [0], [0], [1], [0, 0, 1, 1], [], []>} : vector<16x128xbf16>, vector<128x128xbf16>, vector<16x128xf32> -> vector<16x128xf32>
    %29 = arith.mulf %28, %11 : vector<16x128xf32>
    %cst_24 = arith.constant dense<0.000000e+00> : vector<16xf32>
    %30 = vector.multi_reduction <add>, %29, %cst_24 [1] : vector<16x128xf32> to vector<16xf32>
    %31 = vector.shape_cast %30 : vector<16xf32> to vector<16x1xf32>
    %c3 = arith.constant 3 : index
    %c0_25 = arith.constant 0 : index
    %c0_26 = arith.constant 0 : index
    %32 = vector.load %arg7[%c3, %c0_25, %c0_26] : memref<4x128x128xbf16, #tpu.memory_space<vmem>>, vector<1x128x128xbf16>
    %33 = vector.shape_cast %32 : vector<1x128x128xbf16> to vector<128x128xbf16>
    %cst_27 = arith.constant dense<0.000000e+00> : vector<16x128xf32>
    %34 = tpu.matmul %12, %33, %cst_27 {dimension_numbers = #tpu.dot_dimension_numbers<[1], [0], [0], [1], [0, 0, 1, 1], [], []>} : vector<16x128xbf16>, vector<128x128xbf16>, vector<16x128xf32> -> vector<16x128xf32>
    %35 = arith.mulf %34, %11 : vector<16x128xf32>
    %cst_28 = arith.constant dense<0.000000e+00> : vector<16xf32>
    %36 = vector.multi_reduction <add>, %35, %cst_28 [1] : vector<16x128xf32> to vector<16xf32>
    %37 = vector.shape_cast %36 : vector<16xf32> to vector<16x1xf32>
    %cst_29 = arith.constant 0.000000e+00 : f32
    %38 = vector.broadcast %cst_29 : f32 to vector<16x124xf32>
    %39 = tpu.concatenate %19, %25, %31, %37, %38 in 1 : vector<16x1xf32>, vector<16x1xf32>, vector<16x1xf32>, vector<16x1xf32>, vector<16x124xf32> -> vector<16x128xf32>
    %c0_30 = arith.constant 0 : index
    %c0_31 = arith.constant 0 : index
    %40 = vector.load %arg8[%c0_30, %c0_31] : memref<128x128xbf16, #tpu.memory_space<vmem>>, vector<128x128xbf16>
    %cst_32 = arith.constant dense<0.000000e+00> : vector<16x128xf32>
    %41 = tpu.matmul %12, %40, %cst_32 {dimension_numbers = #tpu.dot_dimension_numbers<[1], [0], [0], [1], [0, 0, 1, 1], [], []>} : vector<16x128xbf16>, vector<128x128xbf16>, vector<16x128xf32> -> vector<16x128xf32>
    %c0_33 = arith.constant 0 : index
    %c0_34 = arith.constant 0 : index
    %42 = vector.load %arg9[%c0_33, %c0_34] : memref<128x128xbf16, #tpu.memory_space<vmem>>, vector<128x128xbf16>
    %cst_35 = arith.constant dense<0.000000e+00> : vector<16x128xf32>
    %43 = tpu.matmul %13, %42, %cst_35 {dimension_numbers = #tpu.dot_dimension_numbers<[1], [0], [0], [1], [0, 0, 1, 1], [], []>} : vector<16x128xbf16>, vector<128x128xbf16>, vector<16x128xf32> -> vector<16x128xf32>
    %44 = arith.addf %41, %43 : vector<16x128xf32>
    %c0_36 = arith.constant 0 : index
    %c0_37 = arith.constant 0 : index
    %45 = vector.load %arg10[%c0_36, %c0_37] : memref<1x128xf32, #tpu.memory_space<vmem>>, vector<1x128xf32>
    %46 = vector.broadcast %45 : vector<1x128xf32> to vector<16x128xf32>
    %47 = arith.addf %44, %46 : vector<16x128xf32>
    %48 = arith.addf %39, %47 : vector<16x128xf32>
    %c0_38 = arith.constant 0 : index
    %c0_39 = arith.constant 0 : index
    %49 = vector.load %arg11[%c0_38, %c0_39] : memref<16x128xf32, #tpu.memory_space<vmem>>, vector<16x128xf32>
    tpu.vector_store %arg11[%c0_38, %c0_39], %48 {strides = array<i32>} : memref<16x128xf32, #tpu.memory_space<vmem>>, vector<16x128xf32>,
    return
  }
  func.func @transform_0(%arg0: i32) -> (i32, i32) {
    %c0_i32 = arith.constant 0 : i32
    %c0_i32_0 = arith.constant 0 : i32
    return %arg0, %c0_i32 : i32, i32
  }
  func.func @transform_1(%arg0: i32) -> (i32, i32) {
    %c0_i32 = arith.constant 0 : i32
    %c0_i32_0 = arith.constant 0 : i32
    return %arg0, %c0_i32 : i32, i32
  }
  func.func @transform_2(%arg0: i32) -> (i32, i32) {
    %c0_i32 = arith.constant 0 : i32
    %c0_i32_0 = arith.constant 0 : i32
    %c0_i32_1 = arith.constant 0 : i32
    return %c0_i32, %c0_i32_0 : i32, i32
  }
  func.func @transform_3(%arg0: i32) -> (i32, i32) {
    %c0_i32 = arith.constant 0 : i32
    %c0_i32_0 = arith.constant 0 : i32
    %c0_i32_1 = arith.constant 0 : i32
    return %c0_i32, %c0_i32_0 : i32, i32
  }
  func.func @transform_4(%arg0: i32) -> (i32, i32) {
    %c0_i32 = arith.constant 0 : i32
    %c0_i32_0 = arith.constant 0 : i32
    %c0_i32_1 = arith.constant 0 : i32
    return %c0_i32, %c0_i32_0 : i32, i32
  }
  func.func @transform_5(%arg0: i32) -> (i32, i32) {
    %c0_i32 = arith.constant 0 : i32
    %c0_i32_0 = arith.constant 0 : i32
    %c0_i32_1 = arith.constant 0 : i32
    return %c0_i32, %c0_i32_0 : i32, i32
  }
  func.func @transform_6(%arg0: i32) -> (i32, i32, i32) {
    %c0_i32 = arith.constant 0 : i32
    %c0_i32_0 = arith.constant 0 : i32
    %c0_i32_1 = arith.constant 0 : i32
    %c0_i32_2 = arith.constant 0 : i32
    return %c0_i32, %c0_i32_0, %c0_i32_1 : i32, i32, i32
  }
  func.func @transform_7(%arg0: i32) -> (i32, i32) {
    %c0_i32 = arith.constant 0 : i32
    %c0_i32_0 = arith.constant 0 : i32
    %c0_i32_1 = arith.constant 0 : i32
    return %c0_i32, %c0_i32_0 : i32, i32
  }
  func.func @transform_8(%arg0: i32) -> (i32, i32) {
    %c0_i32 = arith.constant 0 : i32
    %c0_i32_0 = arith.constant 0 : i32
    %c0_i32_1 = arith.constant 0 : i32
    return %c0_i32, %c0_i32_0 : i32, i32
  }
  func.func @transform_9(%arg0: i32) -> (i32, i32) {
    %c0_i32 = arith.constant 0 : i32
    %c0_i32_0 = arith.constant 0 : i32
    %c0_i32_1 = arith.constant 0 : i32
    return %c0_i32, %c0_i32_0 : i32, i32
  }
  func.func @transform_10(%arg0: i32) -> (i32, i32) {
    %c0_i32 = arith.constant 0 : i32
    %c0_i32_0 = arith.constant 0 : i32
    return %arg0, %c0_i32 : i32, i32
  }
}

</mosaic_0001>

<llo_original>
// kernel: tpu_custom_call.1
$region0: #{tpu_custom_call.1}
  #allocation0 [shape = 'u32[]', space=smem, size = 0x4, offset = 0x4, fixed_abs, tag = 'smem constant byte address 0x4 - core index']
  #allocation1 [shape = 'u32[144,128]{1,0:T(1,128)}', space=vmem, size = 0x12000, scoped, tag = 'internal scratch']
  %s0 = inlined_call_operand.hbm [shape: bf16[16,128], index: 0, kind: input, shape index: {}]
  %s1 = inlined_call_operand.hbm [shape: bf16[16,128], index: 1, kind: input, shape index: {}]
  %s2 = inlined_call_operand.hbm [shape: bf16[128,128], index: 2, kind: input, shape index: {}]
  %s3 = inlined_call_operand.vmem [shape: f32[1,128], index: 3, kind: input, shape index: {}]
  %s4 = inlined_call_operand.hbm [shape: bf16[128,128], index: 4, kind: input, shape index: {}]
  %s5 = inlined_call_operand.vmem [shape: f32[1,128], index: 5, kind: input, shape index: {}]
  %s6 = inlined_call_operand.hbm [shape: bf16[4,128,128], index: 6, kind: input, shape index: {}]
  %s7 = inlined_call_operand.hbm [shape: bf16[128,128], index: 7, kind: input, shape index: {}]
  %s8 = inlined_call_operand.hbm [shape: bf16[128,128], index: 8, kind: input, shape index: {}]
  %s9 = inlined_call_operand.vmem [shape: f32[1,128], index: 9, kind: input, shape index: {}]
  %s10 = inlined_call_operand.hbm [shape: f32[16,128], index: 10, kind: output, shape index: {}]
  %s11 = sld [smem:[#allocation0]]
  $region78: #{tpu_custom_call.1} parent=0
    _
  %s13 = ssub.s32 1, %s11
  %s14 = scalar_select 0, %s13, %s11
  $region1: #{tpu_custom_call.1} parent=0
    #allocation2 [shape = 'u8[4096]{0}', space=vmem, size = 0x1000, scoped, tag = 'input window, operand 0, single buffered']
    #allocation3 [shape = 's32[1]{0}', space=sflag, size = 0x4, scoped, tag = 'scoped memory for tpu_custom_call.1']
    #allocation4 [shape = 's32[1]{0}', space=sflag, size = 0x4, scoped, tag = 'scoped memory for tpu_custom_call.1']
    #allocation5 [shape = 'u8[4096]{0}', space=vmem, size = 0x1000, scoped, tag = 'input window, operand 1, single buffered']
    #allocation6 [shape = 's32[1]{0}', space=sflag, size = 0x4, scoped, tag = 'scoped memory for tpu_custom_call.1']
    #allocation7 [shape = 'u8[32768]{0}', space=vmem, size = 0x8000, scoped, tag = 'input window, operand 2, single buffered']
    #allocation8 [shape = 'u8[32768]{0}', space=vmem, size = 0x8000, scoped, tag = 'input window, operand 4, single buffered']
    #allocation9 [shape = 's32[1]{0}', space=sflag, size = 0x4, scoped, tag = 'scoped memory for tpu_custom_call.1']
    #allocation10 [shape = 'u8[131072]{0}', space=vmem, size = 0x20000, scoped, tag = 'input window, operand 6, single buffered']
    #allocation11 [shape = 'u8[32768]{0}', space=vmem, size = 0x8000, scoped, tag = 'input window, operand 7, single buffered']
    #allocation12 [shape = 's32[1]{0}', space=sflag, size = 0x4, scoped, tag = 'scoped memory for tpu_custom_call.1']
    #allocation13 [shape = 'u8[32768]{0}', space=vmem, size = 0x8000, scoped, tag = 'input window, operand 8, single buffered']
    #allocation14 [shape = 'u8[8192]{0}', space=vmem, size = 0x2000, scoped, tag = 'output window, operand 0, single buffered']
    %15 = vsyncpa [#allocation3], 0
    %16 = vsyncpa [#allocation6], 0
    %17 = vsyncpa [#allocation9], 0
    %18 = vsyncpa [#allocation12], 0
    %19 = vsyncpa [#allocation4], 0
    // Predicated region
    $region2: #{tpu_custom_call.1} parent=1 // pred_check
      _
    $region3: #{tpu_custom_call.1} parent=1 // pred_check_branch
      %21 = sbr.rel (0) target = $region5
    $region4: #{tpu_custom_call.1} parent=1 // pred_region
      %s23 = ssub.s32 128, 128
      %24 = vsyncadd [#allocation3], %s23
      %s25 = sshll.u32 [#allocation2], 4
      %s26 = int_to_ptr.vmem [resolvable:$true] %s25
      %31 = dma.hbm_to_vmem [thread:$0]  %s0, 128, %s26, [#allocation3], 64, 64, 4
    $region5: #{tpu_custom_call.1} parent=1 // pred_fallthru
      _
    // Predicated region
    $region6: #{tpu_custom_call.1} parent=1 // pred_check
      _
    $region7: #{tpu_custom_call.1} parent=1 // pred_check_branch
      %33 = sbr.rel (0) target = $region9
    $region8: #{tpu_custom_call.1} parent=1 // pred_region
      %s35 = ssub.s32 128, 128
      %36 = vsyncadd [#allocation6], %s35
      %s37 = sshll.u32 [#allocation5], 4
      %s38 = int_to_ptr.vmem [resolvable:$true] %s37
      %43 = dma.hbm_to_vmem [thread:$0]  %s1, 128, %s38, [#allocation6], 64, 64, 4
    $region9: #{tpu_custom_call.1} parent=1 // pred_fallthru
      _
    // Predicated region
    $region10: #{tpu_custom_call.1} parent=1 // pred_check
      _
    $region11: #{tpu_custom_call.1} parent=1 // pred_check_branch
      %45 = sbr.rel (0) target = $region13
    $region12: #{tpu_custom_call.1} parent=1 // pred_region
      %s47 = ssub.s32 1024, 1024
      %48 = vsyncadd [#allocation6], %s47
      %s49 = sshll.u32 [#allocation7], 4
      %s50 = int_to_ptr.vmem [resolvable:$true] %s49
      %55 = dma.hbm_to_vmem [thread:$0]  %s2, 1024, %s50, [#allocation6], 64, 64, 4
    $region13: #{tpu_custom_call.1} parent=1 // pred_fallthru
      _
    // Predicated region
    $region14: #{tpu_custom_call.1} parent=1 // pred_check
      _
    $region15: #{tpu_custom_call.1} parent=1 // pred_check_branch
      %57 = sbr.rel (0) target = $region17
    $region16: #{tpu_custom_call.1} parent=1 // pred_region
      _
    $region17: #{tpu_custom_call.1} parent=1 // pred_fallthru
      _
    // Predicated region
    $region18: #{tpu_custom_call.1} parent=1 // pred_check
      _
    $region19: #{tpu_custom_call.1} parent=1 // pred_check_branch
      %59 = sbr.rel (0) target = $region21
    $region20: #{tpu_custom_call.1} parent=1 // pred_region
      %s61 = ssub.s32 1024, 1024
      %62 = vsyncadd [#allocation9], %s61
      %s63 = sshll.u32 [#allocation8], 4
      %s64 = int_to_ptr.vmem [resolvable:$true] %s63
      %69 = dma.hbm_to_vmem [thread:$0]  %s4, 1024, %s64, [#allocation9], 64, 64, 4
    $region21: #{tpu_custom_call.1} parent=1 // pred_fallthru
      _
    // Predicated region
    $region22: #{tpu_custom_call.1} parent=1 // pred_check
      _
    $region23: #{tpu_custom_call.1} parent=1 // pred_check_branch
      %71 = sbr.rel (0) target = $region25
    $region24: #{tpu_custom_call.1} parent=1 // pred_region
      _
    $region25: #{tpu_custom_call.1} parent=1 // pred_fallthru
      _
    // Predicated region
    $region26: #{tpu_custom_call.1} parent=1 // pred_check
      _
    $region27: #{tpu_custom_call.1} parent=1 // pred_check_branch
      %73 = sbr.rel (0) target = $region29
    $region28: #{tpu_custom_call.1} parent=1 // pred_region
      %s75 = ssub.s32 4096, 4096
      %76 = vsyncadd [#allocation9], %s75
      %s77 = sshll.u32 [#allocation10], 4
      %s78 = int_to_ptr.vmem [resolvable:$true] %s77
      %83 = dma.hbm_to_vmem [thread:$0]  %s6, 4096, %s78, [#allocation9], 64, 64, 4
    $region29: #{tpu_custom_call.1} parent=1 // pred_fallthru
      _
    // Predicated region
    $region30: #{tpu_custom_call.1} parent=1 // pred_check
      _
    $region31: #{tpu_custom_call.1} parent=1 // pred_check_branch
      %85 = sbr.rel (0) target = $region33
    $region32: #{tpu_custom_call.1} parent=1 // pred_region
      %s87 = ssub.s32 1024, 1024
      %88 = vsyncadd [#allocation12], %s87
      %s89 = sshll.u32 [#allocation11], 4
      %s90 = int_to_ptr.vmem [resolvable:$true] %s89
      %95 = dma.hbm_to_vmem [thread:$0]  %s7, 1024, %s90, [#allocation12], 64, 64, 4
    $region33: #{tpu_custom_call.1} parent=1 // pred_fallthru
      _
    // Predicated region
    $region34: #{tpu_custom_call.1} parent=1 // pred_check
      _
    $region35: #{tpu_custom_call.1} parent=1 // pred_check_branch
      %97 = sbr.rel (0) target = $region37
    $region36: #{tpu_custom_call.1} parent=1 // pred_region
      %s99 = ssub.s32 1024, 1024
      %100 = vsyncadd [#allocation12], %s99
      %s101 = sshll.u32 [#allocation13], 4
      %s102 = int_to_ptr.vmem [resolvable:$true] %s101
      %107 = dma.hbm_to_vmem [thread:$0]  %s8, 1024, %s102, [#allocation12], 64, 64, 4
    $region37: #{tpu_custom_call.1} parent=1 // pred_fallthru
      _
    // Predicated region
    $region38: #{tpu_custom_call.1} parent=1 // pred_check
      _
    $region39: #{tpu_custom_call.1} parent=1 // pred_check_branch
      %109 = sbr.rel (0) target = $region41
    $region40: #{tpu_custom_call.1} parent=1 // pred_region
      _
    $region41: #{tpu_custom_call.1} parent=1 // pred_fallthru
      _
    // Predicated region
    $region42: #{tpu_custom_call.1} parent=1 // pred_check
      _
    $region43: #{tpu_custom_call.1} parent=1 // pred_check_branch
      %111 = sbr.rel (0) target = $region45
    $region44: #{tpu_custom_call.1} parent=1 // pred_region
      %112 = dma.done [#allocation3], 128
    $region45: #{tpu_custom_call.1} parent=1 // pred_fallthru
      _
    // Predicated region
    $region46: #{tpu_custom_call.1} parent=1 // pred_check
      _
    $region47: #{tpu_custom_call.1} parent=1 // pred_check_branch
      %114 = sbr.rel (0) target = $region49
    $region48: #{tpu_custom_call.1} parent=1 // pred_region
      %115 = dma.done [#allocation6], 128
    $region49: #{tpu_custom_call.1} parent=1 // pred_fallthru
      _
    // Predicated region
    $region50: #{tpu_custom_call.1} parent=1 // pred_check
      _
    $region51: #{tpu_custom_call.1} parent=1 // pred_check_branch
      %117 = sbr.rel (0) target = $region53
    $region52: #{tpu_custom_call.1} parent=1 // pred_region
      %118 = dma.done [#allocation6], 1024
    $region53: #{tpu_custom_call.1} parent=1 // pred_fallthru
      _
    // Predicated region
    $region54: #{tpu_custom_call.1} parent=1 // pred_check
      _
    $region55: #{tpu_custom_call.1} parent=1 // pred_check_branch
      %120 = sbr.rel (0) target = $region57
    $region56: #{tpu_custom_call.1} parent=1 // pred_region
      %121 = dma.done [#allocation9], 1024
    $region57: #{tpu_custom_call.1} parent=1 // pred_fallthru
      _
    // Predicated region
    $region58: #{tpu_custom_call.1} parent=1 // pred_check
      _
    $region59: #{tpu_custom_call.1} parent=1 // pred_check_branch
      %123 = sbr.rel (0) target = $region61
    $region60: #{tpu_custom_call.1} parent=1 // pred_region
      %124 = dma.done [#allocation9], 4096
    $region61: #{tpu_custom_call.1} parent=1 // pred_fallthru
      _
    // Predicated region
    $region62: #{tpu_custom_call.1} parent=1 // pred_check
      _
    $region63: #{tpu_custom_call.1} parent=1 // pred_check_branch
      %126 = sbr.rel (0) target = $region65
    $region64: #{tpu_custom_call.1} parent=1 // pred_region
      %127 = dma.done [#allocation12], 1024
    $region65: #{tpu_custom_call.1} parent=1 // pred_fallthru
      _
    // Predicated region
    $region66: #{tpu_custom_call.1} parent=1 // pred_check
      _
    $region67: #{tpu_custom_call.1} parent=1 // pred_check_branch
      %129 = sbr.rel (0) target = $region69
    $region68: #{tpu_custom_call.1} parent=1 // pred_region
      %130 = dma.done [#allocation12], 1024
    $region69: #{tpu_custom_call.1} parent=1 // pred_fallthru
      _
    %v132 = vld [vmem:[#allocation2] sm:$0xf]
    %v133 = vld [vmem:[#allocation2 + $0x4] sm:$0xf]
    %v134 = vld [vmem:[#allocation7] sm:$0xf]
    %v135 = vld [vmem:[#allocation7 + $0x4] sm:$0xf]
    %v136 = vld [vmem:[#allocation7 + $0x8] sm:$0xf]
    %v137 = vld [vmem:[#allocation7 + $0xc] sm:$0xf]
    %v138 = vld [vmem:[#allocation7 + $0x10] sm:$0xf]
    %v139 = vld [vmem:[#allocation7 + $0x14] sm:$0xf]
    %v140 = vld [vmem:[#allocation7 + $0x18] sm:$0xf]
    %v141 = vld [vmem:[#allocation7 + $0x1c] sm:$0xf]
    %v142 = vld [vmem:[#allocation7 + $0x20] sm:$0xf]
    %v143 = vld [vmem:[#allocation7 + $0x24] sm:$0xf]
    %v144 = vld [vmem:[#allocation7 + $0x28] sm:$0xf]
    %v145 = vld [vmem:[#allocation7 + $0x2c] sm:$0xf]
    %v146 = vld [vmem:[#allocation7 + $0x30] sm:$0xf]
    %v147 = vld [vmem:[#allocation7 + $0x34] sm:$0xf]
    %v148 = vld [vmem:[#allocation7 + $0x38] sm:$0xf]
    %v149 = vld [vmem:[#allocation7 + $0x3c] sm:$0xf]
    %v150 = vld [vmem:[%s3] sm:$0x1]
    %v152 = vlaneseq
    %v153 = vshrl.u32 %v152, 7
    %v154 = vsub.s32 0, %v153
    %v155 = vrot.slane %v150, %v154
    %v159 = vunpack.c.l.b16 %v132
    %v160 = vunpack.c.l.b16 %v133
    %v161 = vpack.c.b16 %v160, %v159
    %v179 = vunpack.c.l.b16 %v134
    %v180 = vunpack.c.l.b16 %v135
    %v181 = vunpack.c.l.b16 %v136
    %v182 = vunpack.c.l.b16 %v137
    %v183 = vunpack.c.l.b16 %v138
    %v184 = vunpack.c.l.b16 %v139
    %v185 = vunpack.c.l.b16 %v140
    %v186 = vunpack.c.l.b16 %v141
    %v187 = vunpack.c.l.b16 %v142
    %v188 = vunpack.c.l.b16 %v143
    %v189 = vunpack.c.l.b16 %v144
    %v190 = vunpack.c.l.b16 %v145
    %v191 = vunpack.c.l.b16 %v146
    %v192 = vunpack.c.l.b16 %v147
    %v193 = vunpack.c.l.b16 %v148
    %v194 = vunpack.c.l.b16 %v149
    %v195 = vpack.c.b16 %v180, %v179
    %v196 = vpack.c.b16 %v182, %v181
    %v197 = vpack.c.b16 %v184, %v183
    %v198 = vpack.c.b16 %v186, %v185
    %v199 = vpack.c.b16 %v188, %v187
    %v200 = vpack.c.b16 %v190, %v189
    %v201 = vpack.c.b16 %v192, %v191
    %v202 = vpack.c.b16 %v194, %v193
    %211 = vmatprep.subr.bf16.mxu0 0
    %212 = vmatpush1.bf16.msra.mxu0 %v195
    %213 = vmatprep.subr.bf16.mxu0 0
    %214 = vmatpush1.bf16.msra.mxu0 %v196
    %215 = vmatprep.subr.bf16.mxu0 0
    %216 = vmatpush1.bf16.msra.mxu0 %v197
    %217 = vmatprep.subr.bf16.mxu0 0
    %218 = vmatpush1.bf16.msra.mxu0 %v198
    %219 = vmatprep.subr.bf16.mxu0 0
    %220 = vmatpush1.bf16.msra.mxu0 %v199
    %221 = vmatprep.subr.bf16.mxu0 0
    %222 = vmatpush1.bf16.msra.mxu0 %v200
    %223 = vmatprep.subr.bf16.mxu0 0
    %224 = vmatpush1.bf16.msra.mxu0 %v201
    %225 = vmatprep.subr.bf16.mxu0 0
    %226 = vmatpush1.bf16.msra.mxu0 %v202
    %227 = vmatprep.subr.bf16.mxu0 0
    %228 = vmatpush1.bf16.msra.mxu0 0
    %229 = vmatprep.subr.bf16.mxu0 0
    %230 = vmatpush1.bf16.msra.mxu0 0
    %231 = vmatprep.subr.bf16.mxu0 0
    %232 = vmatpush1.bf16.msra.mxu0 0
    %233 = vmatprep.subr.bf16.mxu0 0
    %234 = vmatpush1.bf16.msra.mxu0 0
    %235 = vmatprep.subr.bf16.mxu0 0
    %236 = vmatpush1.bf16.msra.mxu0 0
    %237 = vmatprep.subr.bf16.mxu0 0
    %238 = vmatpush1.bf16.msra.mxu0 0
    %239 = vmatprep.subr.bf16.mxu0 0
    %240 = vmatpush1.bf16.msra.mxu0 0
    %241 = vmatprep.subr.bf16.mxu0 0
    %242 = vmatpush1.bf16.msra.mxu0 0
    %243 = vmatprep.mubr.bf16.mxu0 0
    %244 = vmatmul.mubr.bf16.gmra.mrb[0].mxu0 %v161
    %v245 = vpop.f32.mrb[0].mxu0
    %v246 = vadd.f32 %v155, %v245
    %v247 = vpop.f32.mrb[0].mxu0
    %v248 = vpop.f32.mrb[0].mxu0
    %v249 = vadd.f32 %v155, %v248
    %v250 = vpop.f32.mrb[0].mxu0
    %251 = vdwg.mxu0
    %v252 = vld [vmem:[#allocation5] sm:$0xf]
    %v253 = vld [vmem:[#allocation5 + $0x4] sm:$0xf]
    %v254 = vld [vmem:[#allocation8] sm:$0xf]
    %v255 = vld [vmem:[#allocation8 + $0x4] sm:$0xf]
    %v256 = vld [vmem:[#allocation8 + $0x8] sm:$0xf]
    %v257 = vld [vmem:[#allocation8 + $0xc] sm:$0xf]
    %v258 = vld [vmem:[#allocation8 + $0x10] sm:$0xf]
    %v259 = vld [vmem:[#allocation8 + $0x14] sm:$0xf]
    %v260 = vld [vmem:[#allocation8 + $0x18] sm:$0xf]
    %v261 = vld [vmem:[#allocation8 + $0x1c] sm:$0xf]
    %v262 = vld [vmem:[#allocation8 + $0x20] sm:$0xf]
    %v263 = vld [vmem:[#allocation8 + $0x24] sm:$0xf]
    %v264 = vld [vmem:[#allocation8 + $0x28] sm:$0xf]
    %v265 = vld [vmem:[#allocation8 + $0x2c] sm:$0xf]
    %v266 = vld [vmem:[#allocation8 + $0x30] sm:$0xf]
    %v267 = vld [vmem:[#allocation8 + $0x34] sm:$0xf]
    %v268 = vld [vmem:[#allocation8 + $0x38] sm:$0xf]
    %v269 = vld [vmem:[#allocation8 + $0x3c] sm:$0xf]
    %v270 = vld [vmem:[%s5] sm:$0x1]
    %v272 = vlaneseq
    %v273 = vshrl.u32 %v272, 7
    %v274 = vsub.s32 0, %v273
    %v275 = vrot.slane %v270, %v274
    %v279 = vunpack.c.l.b16 %v252
    %v280 = vunpack.c.l.b16 %v253
    %v281 = vpack.c.b16 %v280, %v279
    %v299 = vunpack.c.l.b16 %v254
    %v300 = vunpack.c.l.b16 %v255
    %v301 = vunpack.c.l.b16 %v256
    %v302 = vunpack.c.l.b16 %v257
    %v303 = vunpack.c.l.b16 %v258
    %v304 = vunpack.c.l.b16 %v259
    %v305 = vunpack.c.l.b16 %v260
    %v306 = vunpack.c.l.b16 %v261
    %v307 = vunpack.c.l.b16 %v262
    %v308 = vunpack.c.l.b16 %v263
    %v309 = vunpack.c.l.b16 %v264
    %v310 = vunpack.c.l.b16 %v265
    %v311 = vunpack.c.l.b16 %v266
    %v312 = vunpack.c.l.b16 %v267
    %v313 = vunpack.c.l.b16 %v268
    %v314 = vunpack.c.l.b16 %v269
    %v315 = vpack.c.b16 %v300, %v299
    %v316 = vpack.c.b16 %v302, %v301
    %v317 = vpack.c.b16 %v304, %v303
    %v318 = vpack.c.b16 %v306, %v305
    %v319 = vpack.c.b16 %v308, %v307
    %v320 = vpack.c.b16 %v310, %v309
    %v321 = vpack.c.b16 %v312, %v311
    %v322 = vpack.c.b16 %v314, %v313
    %331 = vmatprep.subr.bf16.mxu0 0
    %332 = vmatpush1.bf16.msra.mxu0 %v315
    %333 = vmatprep.subr.bf16.mxu0 0
    %334 = vmatpush1.bf16.msra.mxu0 %v316
    %335 = vmatprep.subr.bf16.mxu0 0
    %336 = vmatpush1.bf16.msra.mxu0 %v317
    %337 = vmatprep.subr.bf16.mxu0 0
    %338 = vmatpush1.bf16.msra.mxu0 %v318
    %339 = vmatprep.subr.bf16.mxu0 0
    %340 = vmatpush1.bf16.msra.mxu0 %v319
    %341 = vmatprep.subr.bf16.mxu0 0
    %342 = vmatpush1.bf16.msra.mxu0 %v320
    %343 = vmatprep.subr.bf16.mxu0 0
    %344 = vmatpush1.bf16.msra.mxu0 %v321
    %345 = vmatprep.subr.bf16.mxu0 0
    %346 = vmatpush1.bf16.msra.mxu0 %v322
    %347 = vmatprep.subr.bf16.mxu0 0
    %348 = vmatpush1.bf16.msra.mxu0 0
    %349 = vmatprep.subr.bf16.mxu0 0
    %350 = vmatpush1.bf16.msra.mxu0 0
    %351 = vmatprep.subr.bf16.mxu0 0
    %352 = vmatpush1.bf16.msra.mxu0 0
    %353 = vmatprep.subr.bf16.mxu0 0
    %354 = vmatpush1.bf16.msra.mxu0 0
    %355 = vmatprep.subr.bf16.mxu0 0
    %356 = vmatpush1.bf16.msra.mxu0 0
    %357 = vmatprep.subr.bf16.mxu0 0
    %358 = vmatpush1.bf16.msra.mxu0 0
    %359 = vmatprep.subr.bf16.mxu0 0
    %360 = vmatpush1.bf16.msra.mxu0 0
    %361 = vmatprep.subr.bf16.mxu0 0
    %362 = vmatpush1.bf16.msra.mxu0 0
    %363 = vmatprep.mubr.bf16.mxu0 0
    %364 = vmatmul.mubr.bf16.gmra.mrb[0].mxu0 %v281
    %v365 = vpop.f32.mrb[0].mxu0
    %v366 = vadd.f32 %v275, %v365
    %v367 = vpop.f32.mrb[0].mxu0
    %v368 = vpop.f32.mrb[0].mxu0
    %v369 = vadd.f32 %v275, %v368
    %v370 = vpop.f32.mrb[0].mxu0
    %371 = vdwg.mxu0
    %v372 = vpack.c.bf16 %v249, %v246
    %v373 = vpack.c.bf16 %v369, %v366
    %v374 = vld [vmem:[#allocation10] sm:$0xf]
    %v375 = vld [vmem:[#allocation10 + $0x4] sm:$0xf]
    %v376 = vld [vmem:[#allocation10 + $0x8] sm:$0xf]
    %v377 = vld [vmem:[#allocation10 + $0xc] sm:$0xf]
    %v378 = vld [vmem:[#allocation10 + $0x10] sm:$0xf]
    %v379 = vld [vmem:[#allocation10 + $0x14] sm:$0xf]
    %v380 = vld [vmem:[#allocation10 + $0x18] sm:$0xf]
    %v381 = vld [vmem:[#allocation10 + $0x1c] sm:$0xf]
    %v382 = vld [vmem:[#allocation10 + $0x20] sm:$0xf]
    %v383 = vld [vmem:[#allocation10 + $0x24] sm:$0xf]
    %v384 = vld [vmem:[#allocation10 + $0x28] sm:$0xf]
    %v385 = vld [vmem:[#allocation10 + $0x2c] sm:$0xf]
    %v386 = vld [vmem:[#allocation10 + $0x30] sm:$0xf]
    %v387 = vld [vmem:[#allocation10 + $0x34] sm:$0xf]
    %v388 = vld [vmem:[#allocation10 + $0x38] sm:$0xf]
    %v389 = vld [vmem:[#allocation10 + $0x3c] sm:$0xf]
    %v406 = vunpack.c.l.b16 %v374
    %v407 = vunpack.c.l.b16 %v375
    %v408 = vunpack.c.l.b16 %v376
    %v409 = vunpack.c.l.b16 %v377
    %v410 = vunpack.c.l.b16 %v378
    %v411 = vunpack.c.l.b16 %v379
    %v412 = vunpack.c.l.b16 %v380
    %v413 = vunpack.c.l.b16 %v381
    %v414 = vunpack.c.l.b16 %v382
    %v415 = vunpack.c.l.b16 %v383
    %v416 = vunpack.c.l.b16 %v384
    %v417 = vunpack.c.l.b16 %v385
    %v418 = vunpack.c.l.b16 %v386
    %v419 = vunpack.c.l.b16 %v387
    %v420 = vunpack.c.l.b16 %v388
    %v421 = vunpack.c.l.b16 %v389
    %v422 = vpack.c.b16 %v407, %v406
    %v423 = vpack.c.b16 %v409, %v408
    %v424 = vpack.c.b16 %v411, %v410
    %v425 = vpack.c.b16 %v413, %v412
    %v426 = vpack.c.b16 %v415, %v414
    %v427 = vpack.c.b16 %v417, %v416
    %v428 = vpack.c.b16 %v419, %v418
    %v429 = vpack.c.b16 %v421, %v420
    %438 = vmatprep.subr.bf16.mxu0 0
    %439 = vmatpush1.bf16.msra.mxu0 %v422
    %440 = vmatprep.subr.bf16.mxu0 0
    %441 = vmatpush1.bf16.msra.mxu0 %v423
    %442 = vmatprep.subr.bf16.mxu0 0
    %443 = vmatpush1.bf16.msra.mxu0 %v424
    %444 = vmatprep.subr.bf16.mxu0 0
    %445 = vmatpush1.bf16.msra.mxu0 %v425
    %446 = vmatprep.subr.bf16.mxu0 0
    %447 = vmatpush1.bf16.msra.mxu0 %v426
    %448 = vmatprep.subr.bf16.mxu0 0
    %449 = vmatpush1.bf16.msra.mxu0 %v427
    %450 = vmatprep.subr.bf16.mxu0 0
    %451 = vmatpush1.bf16.msra.mxu0 %v428
    %452 = vmatprep.subr.bf16.mxu0 0
    %453 = vmatpush1.bf16.msra.mxu0 %v429
    %454 = vmatprep.subr.bf16.mxu0 0
    %455 = vmatpush1.bf16.msra.mxu0 0
    %456 = vmatprep.subr.bf16.mxu0 0
    %457 = vmatpush1.bf16.msra.mxu0 0
    %458 = vmatprep.subr.bf16.mxu0 0
    %459 = vmatpush1.bf16.msra.mxu0 0
    %460 = vmatprep.subr.bf16.mxu0 0
    %461 = vmatpush1.bf16.msra.mxu0 0
    %462 = vmatprep.subr.bf16.mxu0 0
    %463 = vmatpush1.bf16.msra.mxu0 0
    %464 = vmatprep.subr.bf16.mxu0 0
    %465 = vmatpush1.bf16.msra.mxu0 0
    %466 = vmatprep.subr.bf16.mxu0 0
    %467 = vmatpush1.bf16.msra.mxu0 0
    %468 = vmatprep.subr.bf16.mxu0 0
    %469 = vmatpush1.bf16.msra.mxu0 0
    %470 = vmatprep.mubr.bf16.mxu0 0
    %471 = vmatmul.mubr.bf16.gmra.mrb[0].mxu0 %v372
    %v472 = vpop.f32.mrb[0].mxu0
    %v473 = vadd.f32 0.0, %v472
    %v474 = vpop.f32.mrb[0].mxu0
    %v475 = vpop.f32.mrb[0].mxu0
    %v476 = vadd.f32 0.0, %v475
    %v477 = vpop.f32.mrb[0].mxu0
    %478 = vdwg.mxu0
    %v479 = vmul.f32 %v473, %v366
    %v480 = vmul.f32 %v476, %v369
    %481 = vadd.xlane.f32.xlu0 %v479
    %v482 = vpop.xlane.xlu0 %481
    %483 = vadd.xlane.f32.xlu0 %v480
    %v484 = vpop.xlane.xlu0 %483
    %s485 = scalar_lea.vmem [#allocation10], 64
    %v486 = vld [vmem:[%s485] sm:$0xf]
    %v487 = vld [vmem:[%s485 + $0x4] sm:$0xf]
    %v488 = vld [vmem:[%s485 + $0x8] sm:$0xf]
    %v489 = vld [vmem:[%s485 + $0xc] sm:$0xf]
    %v490 = vld [vmem:[%s485 + $0x10] sm:$0xf]
    %v491 = vld [vmem:[%s485 + $0x14] sm:$0xf]
    %v492 = vld [vmem:[%s485 + $0x18] sm:$0xf]
    %v493 = vld [vmem:[%s485 + $0x1c] sm:$0xf]
    %v494 = vld [vmem:[%s485 + $0x20] sm:$0xf]
    %v495 = vld [vmem:[%s485 + $0x24] sm:$0xf]
    %v496 = vld [vmem:[%s485 + $0x28] sm:$0xf]
    %v497 = vld [vmem:[%s485 + $0x2c] sm:$0xf]
    %v498 = vld [vmem:[%s485 + $0x30] sm:$0xf]
    %v499 = vld [vmem:[%s485 + $0x34] sm:$0xf]
    %v500 = vld [vmem:[%s485 + $0x38] sm:$0xf]
    %v501 = vld [vmem:[%s485 + $0x3c] sm:$0xf]
    %v518 = vunpack.c.l.b16 %v486
    %v519 = vunpack.c.l.b16 %v487
    %v520 = vunpack.c.l.b16 %v488
    %v521 = vunpack.c.l.b16 %v489
    %v522 = vunpack.c.l.b16 %v490
    %v523 = vunpack.c.l.b16 %v491
    %v524 = vunpack.c.l.b16 %v492
    %v525 = vunpack.c.l.b16 %v493
    %v526 = vunpack.c.l.b16 %v494
    %v527 = vunpack.c.l.b16 %v495
    %v528 = vunpack.c.l.b16 %v496
    %v529 = vunpack.c.l.b16 %v497
    %v530 = vunpack.c.l.b16 %v498
    %v531 = vunpack.c.l.b16 %v499
    %v532 = vunpack.c.l.b16 %v500
    %v533 = vunpack.c.l.b16 %v501
    %v534 = vpack.c.b16 %v519, %v518
    %v535 = vpack.c.b16 %v521, %v520
    %v536 = vpack.c.b16 %v523, %v522
    %v537 = vpack.c.b16 %v525, %v524
    %v538 = vpack.c.b16 %v527, %v526
    %v539 = vpack.c.b16 %v529, %v528
    %v540 = vpack.c.b16 %v531, %v530
    %v541 = vpack.c.b16 %v533, %v532
    %550 = vmatprep.subr.bf16.mxu0 0
    %551 = vmatpush1.bf16.msra.mxu0 %v534
    %552 = vmatprep.subr.bf16.mxu0 0
    %553 = vmatpush1.bf16.msra.mxu0 %v535
    %554 = vmatprep.subr.bf16.mxu0 0
    %555 = vmatpush1.bf16.msra.mxu0 %v536
    %556 = vmatprep.subr.bf16.mxu0 0
    %557 = vmatpush1.bf16.msra.mxu0 %v537
    %558 = vmatprep.subr.bf16.mxu0 0
    %559 = vmatpush1.bf16.msra.mxu0 %v538
    %560 = vmatprep.subr.bf16.mxu0 0
    %561 = vmatpush1.bf16.msra.mxu0 %v539
    %562 = vmatprep.subr.bf16.mxu0 0
    %563 = vmatpush1.bf16.msra.mxu0 %v540
    %564 = vmatprep.subr.bf16.mxu0 0
    %565 = vmatpush1.bf16.msra.mxu0 %v541
    %566 = vmatprep.subr.bf16.mxu0 0
    %567 = vmatpush1.bf16.msra.mxu0 0
    %568 = vmatprep.subr.bf16.mxu0 0
    %569 = vmatpush1.bf16.msra.mxu0 0
    %570 = vmatprep.subr.bf16.mxu0 0
    %571 = vmatpush1.bf16.msra.mxu0 0
    %572 = vmatprep.subr.bf16.mxu0 0
    %573 = vmatpush1.bf16.msra.mxu0 0
    %574 = vmatprep.subr.bf16.mxu0 0
    %575 = vmatpush1.bf16.msra.mxu0 0
    %576 = vmatprep.subr.bf16.mxu0 0
    %577 = vmatpush1.bf16.msra.mxu0 0
    %578 = vmatprep.subr.bf16.mxu0 0
    %579 = vmatpush1.bf16.msra.mxu0 0
    %580 = vmatprep.subr.bf16.mxu0 0
    %581 = vmatpush1.bf16.msra.mxu0 0
    %582 = vmatprep.mubr.bf16.mxu0 0
    %583 = vmatmul.mubr.bf16.gmra.mrb[0].mxu0 %v372
    %v584 = vpop.f32.mrb[0].mxu0
    %v585 = vadd.f32 0.0, %v584
    %v586 = vpop.f32.mrb[0].mxu0
    %v587 = vpop.f32.mrb[0].mxu0
    %v588 = vadd.f32 0.0, %v587
    %v589 = vpop.f32.mrb[0].mxu0
    %590 = vdwg.mxu0
    %v591 = vmul.f32 %v585, %v366
    %v592 = vmul.f32 %v588, %v369
    %593 = vadd.xlane.f32.xlu0 %v591
    %v594 = vpop.xlane.xlu0 %593
    %595 = vadd.xlane.f32.xlu0 %v592
    %v596 = vpop.xlane.xlu0 %595
    %s597 = scalar_lea.vmem [#allocation10], 128
    %v598 = vld [vmem:[%s597] sm:$0xf]
    %v599 = vld [vmem:[%s597 + $0x4] sm:$0xf]
    %v600 = vld [vmem:[%s597 + $0x8] sm:$0xf]
    %v601 = vld [vmem:[%s597 + $0xc] sm:$0xf]
    %v602 = vld [vmem:[%s597 + $0x10] sm:$0xf]
    %v603 = vld [vmem:[%s597 + $0x14] sm:$0xf]
    %v604 = vld [vmem:[%s597 + $0x18] sm:$0xf]
    %v605 = vld [vmem:[%s597 + $0x1c] sm:$0xf]
    %v606 = vld [vmem:[%s597 + $0x20] sm:$0xf]
    %v607 = vld [vmem:[%s597 + $0x24] sm:$0xf]
    %v608 = vld [vmem:[%s597 + $0x28] sm:$0xf]
    %v609 = vld [vmem:[%s597 + $0x2c] sm:$0xf]
    %v610 = vld [vmem:[%s597 + $0x30] sm:$0xf]
    %v611 = vld [vmem:[%s597 + $0x34] sm:$0xf]
    %v612 = vld [vmem:[%s597 + $0x38] sm:$0xf]
    %v613 = vld [vmem:[%s597 + $0x3c] sm:$0xf]
    %v630 = vunpack.c.l.b16 %v598
    %v631 = vunpack.c.l.b16 %v599
    %v632 = vunpack.c.l.b16 %v600
    %v633 = vunpack.c.l.b16 %v601
    %v634 = vunpack.c.l.b16 %v602
    %v635 = vunpack.c.l.b16 %v603
    %v636 = vunpack.c.l.b16 %v604
    %v637 = vunpack.c.l.b16 %v605
    %v638 = vunpack.c.l.b16 %v606
    %v639 = vunpack.c.l.b16 %v607
    %v640 = vunpack.c.l.b16 %v608
    %v641 = vunpack.c.l.b16 %v609
    %v642 = vunpack.c.l.b16 %v610
    %v643 = vunpack.c.l.b16 %v611
    %v644 = vunpack.c.l.b16 %v612
    %v645 = vunpack.c.l.b16 %v613
    %v646 = vpack.c.b16 %v631, %v630
    %v647 = vpack.c.b16 %v633, %v632
    %v648 = vpack.c.b16 %v635, %v634
    %v649 = vpack.c.b16 %v637, %v636
    %v650 = vpack.c.b16 %v639, %v638
    %v651 = vpack.c.b16 %v641, %v640
    %v652 = vpack.c.b16 %v643, %v642
    %v653 = vpack.c.b16 %v645, %v644
    %662 = vmatprep.subr.bf16.mxu0 0
    %663 = vmatpush1.bf16.msra.mxu0 %v646
    %664 = vmatprep.subr.bf16.mxu0 0
    %665 = vmatpush1.bf16.msra.mxu0 %v647
    %666 = vmatprep.subr.bf16.mxu0 0
    %667 = vmatpush1.bf16.msra.mxu0 %v648
    %668 = vmatprep.subr.bf16.mxu0 0
    %669 = vmatpush1.bf16.msra.mxu0 %v649
    %670 = vmatprep.subr.bf16.mxu0 0
    %671 = vmatpush1.bf16.msra.mxu0 %v650
    %672 = vmatprep.subr.bf16.mxu0 0
    %673 = vmatpush1.bf16.msra.mxu0 %v651
    %674 = vmatprep.subr.bf16.mxu0 0
    %675 = vmatpush1.bf16.msra.mxu0 %v652
    %676 = vmatprep.subr.bf16.mxu0 0
    %677 = vmatpush1.bf16.msra.mxu0 %v653
    %678 = vmatprep.subr.bf16.mxu0 0
    %679 = vmatpush1.bf16.msra.mxu0 0
    %680 = vmatprep.subr.bf16.mxu0 0
    %681 = vmatpush1.bf16.msra.mxu0 0
    %682 = vmatprep.subr.bf16.mxu0 0
    %683 = vmatpush1.bf16.msra.mxu0 0
    %684 = vmatprep.subr.bf16.mxu0 0
    %685 = vmatpush1.bf16.msra.mxu0 0
    %686 = vmatprep.subr.bf16.mxu0 0
    %687 = vmatpush1.bf16.msra.mxu0 0
    %688 = vmatprep.subr.bf16.mxu0 0
    %689 = vmatpush1.bf16.msra.mxu0 0
    %690 = vmatprep.subr.bf16.mxu0 0
    %691 = vmatpush1.bf16.msra.mxu0 0
    %692 = vmatprep.subr.bf16.mxu0 0
    %693 = vmatpush1.bf16.msra.mxu0 0
    %694 = vmatprep.mubr.bf16.mxu0 0
    %695 = vmatmul.mubr.bf16.gmra.mrb[0].mxu0 %v372
    %v696 = vpop.f32.mrb[0].mxu0
    %v697 = vadd.f32 0.0, %v696
    %v698 = vpop.f32.mrb[0].mxu0
    %v699 = vpop.f32.mrb[0].mxu0
    %v700 = vadd.f32 0.0, %v699
    %v701 = vpop.f32.mrb[0].mxu0
    %702 = vdwg.mxu0
    %v703 = vmul.f32 %v697, %v366
    %v704 = vmul.f32 %v700, %v369
    %705 = vadd.xlane.f32.xlu0 %v703
    %v706 = vpop.xlane.xlu0 %705
    %707 = vadd.xlane.f32.xlu0 %v704
    %v708 = vpop.xlane.xlu0 %707
    %s709 = scalar_lea.vmem [#allocation10], 192
    %v710 = vld [vmem:[%s709] sm:$0xf]
    %v711 = vld [vmem:[%s709 + $0x4] sm:$0xf]
    %v712 = vld [vmem:[%s709 + $0x8] sm:$0xf]
    %v713 = vld [vmem:[%s709 + $0xc] sm:$0xf]
    %v714 = vld [vmem:[%s709 + $0x10] sm:$0xf]
    %v715 = vld [vmem:[%s709 + $0x14] sm:$0xf]
    %v716 = vld [vmem:[%s709 + $0x18] sm:$0xf]
    %v717 = vld [vmem:[%s709 + $0x1c] sm:$0xf]
    %v718 = vld [vmem:[%s709 + $0x20] sm:$0xf]
    %v719 = vld [vmem:[%s709 + $0x24] sm:$0xf]
    %v720 = vld [vmem:[%s709 + $0x28] sm:$0xf]
    %v721 = vld [vmem:[%s709 + $0x2c] sm:$0xf]
    %v722 = vld [vmem:[%s709 + $0x30] sm:$0xf]
    %v723 = vld [vmem:[%s709 + $0x34] sm:$0xf]
    %v724 = vld [vmem:[%s709 + $0x38] sm:$0xf]
    %v725 = vld [vmem:[%s709 + $0x3c] sm:$0xf]
    %v742 = vunpack.c.l.b16 %v710
    %v743 = vunpack.c.l.b16 %v711
    %v744 = vunpack.c.l.b16 %v712
    %v745 = vunpack.c.l.b16 %v713
    %v746 = vunpack.c.l.b16 %v714
    %v747 = vunpack.c.l.b16 %v715
    %v748 = vunpack.c.l.b16 %v716
    %v749 = vunpack.c.l.b16 %v717
    %v750 = vunpack.c.l.b16 %v718
    %v751 = vunpack.c.l.b16 %v719
    %v752 = vunpack.c.l.b16 %v720
    %v753 = vunpack.c.l.b16 %v721
    %v754 = vunpack.c.l.b16 %v722
    %v755 = vunpack.c.l.b16 %v723
    %v756 = vunpack.c.l.b16 %v724
    %v757 = vunpack.c.l.b16 %v725
    %v758 = vpack.c.b16 %v743, %v742
    %v759 = vpack.c.b16 %v745, %v744
    %v760 = vpack.c.b16 %v747, %v746
    %v761 = vpack.c.b16 %v749, %v748
    %v762 = vpack.c.b16 %v751, %v750
    %v763 = vpack.c.b16 %v753, %v752
    %v764 = vpack.c.b16 %v755, %v754
    %v765 = vpack.c.b16 %v757, %v756
    %774 = vmatprep.subr.bf16.mxu0 0
    %775 = vmatpush1.bf16.msra.mxu0 %v758
    %776 = vmatprep.subr.bf16.mxu0 0
    %777 = vmatpush1.bf16.msra.mxu0 %v759
    %778 = vmatprep.subr.bf16.mxu0 0
    %779 = vmatpush1.bf16.msra.mxu0 %v760
    %780 = vmatprep.subr.bf16.mxu0 0
    %781 = vmatpush1.bf16.msra.mxu0 %v761
    %782 = vmatprep.subr.bf16.mxu0 0
    %783 = vmatpush1.bf16.msra.mxu0 %v762
    %784 = vmatprep.subr.bf16.mxu0 0
    %785 = vmatpush1.bf16.msra.mxu0 %v763
    %786 = vmatprep.subr.bf16.mxu0 0
    %787 = vmatpush1.bf16.msra.mxu0 %v764
    %788 = vmatprep.subr.bf16.mxu0 0
    %789 = vmatpush1.bf16.msra.mxu0 %v765
    %790 = vmatprep.subr.bf16.mxu0 0
    %791 = vmatpush1.bf16.msra.mxu0 0
    %792 = vmatprep.subr.bf16.mxu0 0
    %793 = vmatpush1.bf16.msra.mxu0 0
    %794 = vmatprep.subr.bf16.mxu0 0
    %795 = vmatpush1.bf16.msra.mxu0 0
    %796 = vmatprep.subr.bf16.mxu0 0
    %797 = vmatpush1.bf16.msra.mxu0 0
    %798 = vmatprep.subr.bf16.mxu0 0
    %799 = vmatpush1.bf16.msra.mxu0 0
    %800 = vmatprep.subr.bf16.mxu0 0
    %801 = vmatpush1.bf16.msra.mxu0 0
    %802 = vmatprep.subr.bf16.mxu0 0
    %803 = vmatpush1.bf16.msra.mxu0 0
    %804 = vmatprep.subr.bf16.mxu0 0
    %805 = vmatpush1.bf16.msra.mxu0 0
    %806 = vmatprep.mubr.bf16.mxu0 0
    %807 = vmatmul.mubr.bf16.gmra.mrb[0].mxu0 %v372
    %v808 = vpop.f32.mrb[0].mxu0
    %v809 = vadd.f32 0.0, %v808
    %v810 = vpop.f32.mrb[0].mxu0
    %v811 = vpop.f32.mrb[0].mxu0
    %v812 = vadd.f32 0.0, %v811
    %v813 = vpop.f32.mrb[0].mxu0
    %814 = vdwg.mxu0
    %v815 = vmul.f32 %v809, %v366
    %v816 = vmul.f32 %v812, %v369
    %817 = vadd.xlane.f32.xlu0 %v815
    %v818 = vpop.xlane.xlu0 %817
    %819 = vadd.xlane.f32.xlu0 %v816
    %v820 = vpop.xlane.xlu0 %819
    %vm821 = vcmask 7168
    %v822 = vsel %vm821, %v482, %v594
    %v823 = vsel %vm821, %v484, %v596
    %vm824 = vcmask 15360
    %v825 = vsel %vm824, %v822, %v706
    %v826 = vsel %vm824, %v823, %v708
    %vm827 = vcmask 23552
    %v828 = vsel %vm827, %v825, %v818
    %v829 = vsel %vm827, %v826, %v820
    %vm830 = vcmask 31744
    %v831 = vsel %vm830, %v828, 0.0
    %v832 = vsel %vm830, %v829, 0.0
    %v833 = vld [vmem:[#allocation11] sm:$0xf]
    %v834 = vld [vmem:[#allocation11 + $0x4] sm:$0xf]
    %v835 = vld [vmem:[#allocation11 + $0x8] sm:$0xf]
    %v836 = vld [vmem:[#allocation11 + $0xc] sm:$0xf]
    %v837 = vld [vmem:[#allocation11 + $0x10] sm:$0xf]
    %v838 = vld [vmem:[#allocation11 + $0x14] sm:$0xf]
    %v839 = vld [vmem:[#allocation11 + $0x18] sm:$0xf]
    %v840 = vld [vmem:[#allocation11 + $0x1c] sm:$0xf]
    %v841 = vld [vmem:[#allocation11 + $0x20] sm:$0xf]
    %v842 = vld [vmem:[#allocation11 + $0x24] sm:$0xf]
    %v843 = vld [vmem:[#allocation11 + $0x28] sm:$0xf]
    %v844 = vld [vmem:[#allocation11 + $0x2c] sm:$0xf]
    %v845 = vld [vmem:[#allocation11 + $0x30] sm:$0xf]
    %v846 = vld [vmem:[#allocation11 + $0x34] sm:$0xf]
    %v847 = vld [vmem:[#allocation11 + $0x38] sm:$0xf]
    %v848 = vld [vmem:[#allocation11 + $0x3c] sm:$0xf]
    %v849 = vld [vmem:[#allocation13] sm:$0xf]
    %v850 = vld [vmem:[#allocation13 + $0x4] sm:$0xf]
    %v851 = vld [vmem:[#allocation13 + $0x8] sm:$0xf]
    %v852 = vld [vmem:[#allocation13 + $0xc] sm:$0xf]
    %v853 = vld [vmem:[#allocation13 + $0x10] sm:$0xf]
    %v854 = vld [vmem:[#allocation13 + $0x14] sm:$0xf]
    %v855 = vld [vmem:[#allocation13 + $0x18] sm:$0xf]
    %v856 = vld [vmem:[#allocation13 + $0x1c] sm:$0xf]
    %v857 = vld [vmem:[#allocation13 + $0x20] sm:$0xf]
    %v858 = vld [vmem:[#allocation13 + $0x24] sm:$0xf]
    %v859 = vld [vmem:[#allocation13 + $0x28] sm:$0xf]
    %v860 = vld [vmem:[#allocation13 + $0x2c] sm:$0xf]
    %v861 = vld [vmem:[#allocation13 + $0x30] sm:$0xf]
    %v862 = vld [vmem:[#allocation13 + $0x34] sm:$0xf]
    %v863 = vld [vmem:[#allocation13 + $0x38] sm:$0xf]
    %v864 = vld [vmem:[#allocation13 + $0x3c] sm:$0xf]
    %v881 = vunpack.c.l.b16 %v849
    %v882 = vunpack.c.l.b16 %v850
    %v883 = vunpack.c.l.b16 %v851
    %v884 = vunpack.c.l.b16 %v852
    %v885 = vunpack.c.l.b16 %v853
    %v886 = vunpack.c.l.b16 %v854
    %v887 = vunpack.c.l.b16 %v855
    %v888 = vunpack.c.l.b16 %v856
    %v889 = vunpack.c.l.b16 %v857
    %v890 = vunpack.c.l.b16 %v858
    %v891 = vunpack.c.l.b16 %v859
    %v892 = vunpack.c.l.b16 %v860
    %v893 = vunpack.c.l.b16 %v861
    %v894 = vunpack.c.l.b16 %v862
    %v895 = vunpack.c.l.b16 %v863
    %v896 = vunpack.c.l.b16 %v864
    %v897 = vpack.c.b16 %v882, %v881
    %v898 = vpack.c.b16 %v884, %v883
    %v899 = vpack.c.b16 %v886, %v885
    %v900 = vpack.c.b16 %v888, %v887
    %v901 = vpack.c.b16 %v890, %v889
    %v902 = vpack.c.b16 %v892, %v891
    %v903 = vpack.c.b16 %v894, %v893
    %v904 = vpack.c.b16 %v896, %v895
    %913 = vmatprep.subr.bf16.mxu0 0
    %914 = vmatpush1.bf16.msra.mxu0 %v897
    %915 = vmatprep.subr.bf16.mxu0 0
    %916 = vmatpush1.bf16.msra.mxu0 %v898
    %917 = vmatprep.subr.bf16.mxu0 0
    %918 = vmatpush1.bf16.msra.mxu0 %v899
    %919 = vmatprep.subr.bf16.mxu0 0
    %920 = vmatpush1.bf16.msra.mxu0 %v900
    %921 = vmatprep.subr.bf16.mxu0 0
    %922 = vmatpush1.bf16.msra.mxu0 %v901
    %923 = vmatprep.subr.bf16.mxu0 0
    %924 = vmatpush1.bf16.msra.mxu0 %v902
    %925 = vmatprep.subr.bf16.mxu0 0
    %926 = vmatpush1.bf16.msra.mxu0 %v903
    %927 = vmatprep.subr.bf16.mxu0 0
    %928 = vmatpush1.bf16.msra.mxu0 %v904
    %929 = vmatprep.subr.bf16.mxu0 0
    %930 = vmatpush1.bf16.msra.mxu0 0
    %931 = vmatprep.subr.bf16.mxu0 0
    %932 = vmatpush1.bf16.msra.mxu0 0
    %933 = vmatprep.subr.bf16.mxu0 0
    %934 = vmatpush1.bf16.msra.mxu0 0
    %935 = vmatprep.subr.bf16.mxu0 0
    %936 = vmatpush1.bf16.msra.mxu0 0
    %937 = vmatprep.subr.bf16.mxu0 0
    %938 = vmatpush1.bf16.msra.mxu0 0
    %939 = vmatprep.subr.bf16.mxu0 0
    %940 = vmatpush1.bf16.msra.mxu0 0
    %941 = vmatprep.subr.bf16.mxu0 0
    %942 = vmatpush1.bf16.msra.mxu0 0
    %943 = vmatprep.subr.bf16.mxu0 0
    %944 = vmatpush1.bf16.msra.mxu0 0
    %945 = vmatprep.mubr.bf16.mxu0 0
    %946 = vmatmul.mubr.bf16.gmra.mrb[0].mxu0 %v373
    %v947 = vpop.f32.mrb[0].mxu0
    %v948 = vadd.f32 0.0, %v947
    %v949 = vpop.f32.mrb[0].mxu0
    %v950 = vpop.f32.mrb[0].mxu0
    %v951 = vadd.f32 0.0, %v950
    %v952 = vpop.f32.mrb[0].mxu0
    %953 = vdwg.mxu0
    %v970 = vunpack.c.l.b16 %v833
    %v971 = vunpack.c.l.b16 %v834
    %v972 = vunpack.c.l.b16 %v835
    %v973 = vunpack.c.l.b16 %v836
    %v974 = vunpack.c.l.b16 %v837
    %v975 = vunpack.c.l.b16 %v838
    %v976 = vunpack.c.l.b16 %v839
    %v977 = vunpack.c.l.b16 %v840
    %v978 = vunpack.c.l.b16 %v841
    %v979 = vunpack.c.l.b16 %v842
    %v980 = vunpack.c.l.b16 %v843
    %v981 = vunpack.c.l.b16 %v844
    %v982 = vunpack.c.l.b16 %v845
    %v983 = vunpack.c.l.b16 %v846
    %v984 = vunpack.c.l.b16 %v847
    %v985 = vunpack.c.l.b16 %v848
    %v986 = vpack.c.b16 %v971, %v970
    %v987 = vpack.c.b16 %v973, %v972
    %v988 = vpack.c.b16 %v975, %v974
    %v989 = vpack.c.b16 %v977, %v976
    %v990 = vpack.c.b16 %v979, %v978
    %v991 = vpack.c.b16 %v981, %v980
    %v992 = vpack.c.b16 %v983, %v982
    %v993 = vpack.c.b16 %v985, %v984
    %1002 = vmatprep.subr.bf16.mxu0 0
    %1003 = vmatpush1.bf16.msra.mxu0 %v986
    %1004 = vmatprep.subr.bf16.mxu0 0
    %1005 = vmatpush1.bf16.msra.mxu0 %v987
    %1006 = vmatprep.subr.bf16.mxu0 0
    %1007 = vmatpush1.bf16.msra.mxu0 %v988
    %1008 = vmatprep.subr.bf16.mxu0 0
    %1009 = vmatpush1.bf16.msra.mxu0 %v989
    %1010 = vmatprep.subr.bf16.mxu0 0
    %1011 = vmatpush1.bf16.msra.mxu0 %v990
    %1012 = vmatprep.subr.bf16.mxu0 0
    %1013 = vmatpush1.bf16.msra.mxu0 %v991
    %1014 = vmatprep.subr.bf16.mxu0 0
    %1015 = vmatpush1.bf16.msra.mxu0 %v992
    %1016 = vmatprep.subr.bf16.mxu0 0
    %1017 = vmatpush1.bf16.msra.mxu0 %v993
    %1018 = vmatprep.subr.bf16.mxu0 0
    %1019 = vmatpush1.bf16.msra.mxu0 0
    %1020 = vmatprep.subr.bf16.mxu0 0
    %1021 = vmatpush1.bf16.msra.mxu0 0
    %1022 = vmatprep.subr.bf16.mxu0 0
    %1023 = vmatpush1.bf16.msra.mxu0 0
    %1024 = vmatprep.subr.bf16.mxu0 0
    %1025 = vmatpush1.bf16.msra.mxu0 0
    %1026 = vmatprep.subr.bf16.mxu0 0
    %1027 = vmatpush1.bf16.msra.mxu0 0
    %1028 = vmatprep.subr.bf16.mxu0 0
    %1029 = vmatpush1.bf16.msra.mxu0 0
    %1030 = vmatprep.subr.bf16.mxu0 0
    %1031 = vmatpush1.bf16.msra.mxu0 0
    %1032 = vmatprep.subr.bf16.mxu0 0
    %1033 = vmatpush1.bf16.msra.mxu0 0
    %1034 = vmatprep.mubr.bf16.mxu0 0
    %1035 = vmatmul.mubr.bf16.gmra.mrb[0].mxu0 %v372
    %v1036 = vpop.f32.mrb[0].mxu0
    %v1037 = vadd.f32 %v948, %v1036
    %v1038 = vpop.f32.mrb[0].mxu0
    %v1039 = vpop.f32.mrb[0].mxu0
    %v1040 = vadd.f32 %v951, %v1039
    %v1041 = vpop.f32.mrb[0].mxu0
    %1042 = vdwg.mxu0
    %v1043 = vld [vmem:[%s9] sm:$0x1]
    %v1045 = vlaneseq
    %v1046 = vshrl.u32 %v1045, 7
    %v1047 = vsub.s32 0, %v1046
    %v1048 = vrot.slane %v1043, %v1047
    %v1050 = vadd.f32 %v1037, %v1048
    %v1051 = vadd.f32 %v1040, %v1048
    %v1052 = vadd.f32 %v831, %v1050
    %v1053 = vadd.f32 %v832, %v1051
    %1054 = vst [vmem:[#allocation14] sm:$0xff] %v1052
    %1055 = vst [vmem:[#allocation14 + $0x8] sm:$0xff] %v1053
    // Predicated region
    $region70: #{tpu_custom_call.1} parent=1 // pred_check
      _
    $region71: #{tpu_custom_call.1} parent=1 // pred_check_branch
      %1057 = sbr.rel (0) target = $region73
    $region72: #{tpu_custom_call.1} parent=1 // pred_region
      %s1059 = ssub.s32 256, 256
      %1060 = vsyncadd [#allocation4], %s1059
      %s1061 = sshll.u32 [#allocation14], 4
      %s1062 = int_to_ptr.vmem [resolvable:$true] %s1061
      %1067 = dma.vmem_to_hbm [thread:$0]  %s1062, 256, %s10, [#allocation4], 128, 128, 8
    $region73: #{tpu_custom_call.1} parent=1 // pred_fallthru
      _
    // Predicated region
    $region74: #{tpu_custom_call.1} parent=1 // pred_check
      _
    $region75: #{tpu_custom_call.1} parent=1 // pred_check_branch
      %1069 = sbr.rel (0) target = $region77
    $region76: #{tpu_custom_call.1} parent=1 // pred_region
      %1070 = dma.done [#allocation4], 256
    $region77: #{tpu_custom_call.1} parent=1 // pred_fallthru
      _
    %1071 = vsyncpa [#allocation3], 1
    %1072 = vsyncpa [#allocation6], 1
    %1073 = vsyncpa [#allocation9], 1
    %1074 = vsyncpa [#allocation12], 1
    %1075 = vsyncpa [#allocation4], 1

// kernel: tpu_custom_call.1
$region0: #{tpu_custom_call.1}
  #allocation0 [shape = 'u32[]', space=smem, size = 0x4, offset = 0x4, fixed_abs, tag = 'smem constant byte address 0x4 - core index']
  #allocation1 [shape = 'u32[144,128]{1,0:T(1,128)}', space=vmem, size = 0x12000, scoped, tag = 'internal scratch']
  %s0 = inlined_call_operand.hbm [shape: bf16[16,128], index: 0, kind: input, shape index: {}]
  %s1 = inlined_call_operand.hbm [shape: bf16[16,128], index: 1, kind: input, shape index: {}]
  %s2 = inlined_call_operand.hbm [shape: bf16[128,128], index: 2, kind: input, shape index: {}]
  %s3 = inlined_call_operand.vmem [shape: f32[1,128], index: 3, kind: input, shape index: {}]
  %s4 = inlined_call_operand.hbm [shape: bf16[128,128], index: 4, kind: input, shape index: {}]
  %s5 = inlined_call_operand.vmem [shape: f32[1,128], index: 5, kind: input, shape index: {}]
  %s6 = inlined_call_operand.hbm [shape: bf16[4,128,128], index: 6, kind: input, shape index: {}]
  %s7 = inlined_call_operand.hbm [shape: bf16[128,128], index: 7, kind: input, shape index: {}]
  %s8 = inlined_call_operand.hbm [shape: bf16[128,128], index: 8, kind: input, shape index: {}]
  %s9 = inlined_call_operand.vmem [shape: f32[1,128], index: 9, kind: input, shape index: {}]
  %s10 = inlined_call_operand.hbm [shape: f32[16,128], index: 10, kind: output, shape index: {}]
  %s11 = sld [smem:[#allocation0]]
  $region78: #{tpu_custom_call.1} parent=0
    _
  %s13 = ssub.s32 1, %s11
  %s14 = scalar_select 0, %s13, %s11
  $region1: #{tpu_custom_call.1} parent=0
    #allocation2 [shape = 'u8[4096]{0}', space=vmem, size = 0x1000, scoped, tag = 'input window, operand 0, single buffered']
    #allocation3 [shape = 's32[1]{0}', space=sflag, size = 0x4, scoped, tag = 'scoped memory for tpu_custom_call.1']
    #allocation4 [shape = 's32[1]{0}', space=sflag, size = 0x4, scoped, tag = 'scoped memory for tpu_custom_call.1']
    #allocation5 [shape = 'u8[4096]{0}', space=vmem, size = 0x1000, scoped, tag = 'input window, operand 1, single buffered']
    #allocation6 [shape = 's32[1]{0}', space=sflag, size = 0x4, scoped, tag = 'scoped memory for tpu_custom_call.1']
    #allocation7 [shape = 'u8[32768]{0}', space=vmem, size = 0x8000, scoped, tag = 'input window, operand 2, single buffered']
    #allocation8 [shape = 'u8[32768]{0}', space=vmem, size = 0x8000, scoped, tag = 'input window, operand 4, single buffered']
    #allocation9 [shape = 's32[1]{0}', space=sflag, size = 0x4, scoped, tag = 'scoped memory for tpu_custom_call.1']
    #allocation10 [shape = 'u8[131072]{0}', space=vmem, size = 0x20000, scoped, tag = 'input window, operand 6, single buffered']
    #allocation11 [shape = 'u8[32768]{0}', space=vmem, size = 0x8000, scoped, tag = 'input window, operand 7, single buffered']
    #allocation12 [shape = 's32[1]{0}', space=sflag, size = 0x4, scoped, tag = 'scoped memory for tpu_custom_call.1']
    #allocation13 [shape = 'u8[32768]{0}', space=vmem, size = 0x8000, scoped, tag = 'input window, operand 8, single buffered']
    #allocation14 [shape = 'u8[8192]{0}', space=vmem, size = 0x2000, scoped, tag = 'output window, operand 0, single buffered']
    %15 = vsyncpa [#allocation3], 0
    %16 = vsyncpa [#allocation6], 0
    %17 = vsyncpa [#allocation9], 0
    %18 = vsyncpa [#allocation12], 0
    %19 = vsyncpa [#allocation4], 0
    // Predicated region
    $region2: #{tpu_custom_call.1} parent=1 // pred_check
      _
    $region3: #{tpu_custom_call.1} parent=1 // pred_check_branch
      %21 = sbr.rel (0) target = $region5
    $region4: #{tpu_custom_call.1} parent=1 // pred_region
      %s23 = ssub.s32 128, 128
      %24 = vsyncadd [#allocation3], %s23
      %s25 = sshll.u32 [#allocation2], 4
      %s26 = int_to_ptr.vmem [resolvable:$true] %s25
      %31 = dma.hbm_to_vmem [thread:$0]  %s0, 128, %s26, [#allocation3], 64, 64, 4
    $region5: #{tpu_custom_call.1} parent=1 // pred_fallthru
      _
    // Predicated region
    $region6: #{tpu_custom_call.1} parent=1 // pred_check
      _
    $region7: #{tpu_custom_call.1} parent=1 // pred_check_branch
      %33 = sbr.rel (0) target = $region9
    $region8: #{tpu_custom_call.1} parent=1 // pred_region
      %s35 = ssub.s32 128, 128
      %36 = vsyncadd [#allocation6], %s35
      %s37 = sshll.u32 [#allocation5], 4
      %s38 = int_to_ptr.vmem [resolvable:$true] %s37
      %43 = dma.hbm_to_vmem [thread:$0]  %s1, 128, %s38, [#allocation6], 64, 64, 4
    $region9: #{tpu_custom_call.1} parent=1 // pred_fallthru
      _
    // Predicated region
    $region10: #{tpu_custom_call.1} parent=1 // pred_check
      _
    $region11: #{tpu_custom_call.1} parent=1 // pred_check_branch
      %45 = sbr.rel (0) target = $region13
    $region12: #{tpu_custom_call.1} parent=1 // pred_region
      %s47 = ssub.s32 1024, 1024
      %48 = vsyncadd [#allocation6], %s47
      %s49 = sshll.u32 [#allocation7], 4
      %s50 = int_to_ptr.vmem [resolvable:$true] %s49
      %55 = dma.hbm_to_vmem [thread:$0]  %s2, 1024, %s50, [#allocation6], 64, 64, 4
    $region13: #{tpu_custom_call.1} parent=1 // pred_fallthru
      _
    // Predicated region
    $region14: #{tpu_custom_call.1} parent=1 // pred_check
      _
    $region15: #{tpu_custom_call.1} parent=1 // pred_check_branch
      %57 = sbr.rel (0) target = $region17
    $region16: #{tpu_custom_call.1} parent=1 // pred_region
      _
    $region17: #{tpu_custom_call.1} parent=1 // pred_fallthru
      _
    // Predicated region
    $region18: #{tpu_custom_call.1} parent=1 // pred_check
      _
    $region19: #{tpu_custom_call.1} parent=1 // pred_check_branch
      %59 = sbr.rel (0) target = $region21
    $region20: #{tpu_custom_call.1} parent=1 // pred_region
      %s61 = ssub.s32 1024, 1024
      %62 = vsyncadd [#allocation9], %s61
      %s63 = sshll.u32 [#allocation8], 4
      %s64 = int_to_ptr.vmem [resolvable:$true] %s63
      %69 = dma.hbm_to_vmem [thread:$0]  %s4, 1024, %s64, [#allocation9], 64, 64, 4
    $region21: #{tpu_custom_call.1} parent=1 // pred_fallthru
      _
    // Predicated region
    $region22: #{tpu_custom_call.1} parent=1 // pred_check
      _
    $region23: #{tpu_custom_call.1} parent=1 // pred_check_branch
      %71 = sbr.rel (0) target = $region25
    $region24: #{tpu_custom_call.1} parent=1 // pred_region
      _
    $region25: #{tpu_custom_call.1} parent=1 // pred_fallthru
      _
    // Predicated region
    $region26: #{tpu_custom_call.1} parent=1 // pred_check
      _
    $region27: #{tpu_custom_call.1} parent=1 // pred_check_branch
      %73 = sbr.rel (0) target = $region29
    $region28: #{tpu_custom_call.1} parent=1 // pred_region
      %s75 = ssub.s32 4096, 4096
      %76 = vsyncadd [#allocation9], %s75
      %s77 = sshll.u32 [#allocation10], 4
      %s78 = int_to_ptr.vmem [resolvable:$true] %s77
      %83 = dma.hbm_to_vmem [thread:$0]  %s6, 4096, %s78, [#allocation9], 64, 64, 4
    $region29: #{tpu_custom_call.1} parent=1 // pred_fallthru
      _
    // Predicated region
    $region30: #{tpu_custom_call.1} parent=1 // pred_check
      _
    $region31: #{tpu_custom_call.1} parent=1 // pred_check_branch
      %85 = sbr.rel (0) target = $region33
    $region32: #{tpu_custom_call.1} parent=1 // pred_region
      %s87 = ssub.s32 1024, 1024
      %88 = vsyncadd [#allocation12], %s87
      %s89 = sshll.u32 [#allocation11], 4
      %s90 = int_to_ptr.vmem [resolvable:$true] %s89
      %95 = dma.hbm_to_vmem [thread:$0]  %s7, 1024, %s90, [#allocation12], 64, 64, 4
    $region33: #{tpu_custom_call.1} parent=1 // pred_fallthru
      _
    // Predicated region
    $region34: #{tpu_custom_call.1} parent=1 // pred_check
      _
    $region35: #{tpu_custom_call.1} parent=1 // pred_check_branch
      %97 = sbr.rel (0) target = $region37
    $region36: #{tpu_custom_call.1} parent=1 // pred_region
      %s99 = ssub.s32 1024, 1024
      %100 = vsyncadd [#allocation12], %s99
      %s101 = sshll.u32 [#allocation13], 4
      %s102 = int_to_ptr.vmem [resolvable:$true] %s101
      %107 = dma.hbm_to_vmem [thread:$0]  %s8, 1024, %s102, [#allocation12], 64, 64, 4
    $region37: #{tpu_custom_call.1} parent=1 // pred_fallthru
      _
    // Predicated region
    $region38: #{tpu_custom_call.1} parent=1 // pred_check
      _
    $region39: #{tpu_custom_call.1} parent=1 // pred_check_branch
      %109 = sbr.rel (0) target = $region41
    $region40: #{tpu_custom_call.1} parent=1 // pred_region
      _
    $region41: #{tpu_custom_call.1} parent=1 // pred_fallthru
      _
    // Predicated region
    $region42: #{tpu_custom_call.1} parent=1 // pred_check
      _
    $region43: #{tpu_custom_call.1} parent=1 // pred_check_branch
      %111 = sbr.rel (0) target = $region45
    $region44: #{tpu_custom_call.1} parent=1 // pred_region
      %112 = dma.done [#allocation3], 128
    $region45: #{tpu_custom_call.1} parent=1 // pred_fallthru
      _
    // Predicated region
    $region46: #{tpu_custom_call.1} parent=1 // pred_check
      _
    $region47: #{tpu_custom_call.1} parent=1 // pred_check_branch
      %114 = sbr.rel (0) target = $region49
    $region48: #{tpu_custom_call.1} parent=1 // pred_region
      %115 = dma.done [#allocation6], 128
    $region49: #{tpu_custom_call.1} parent=1 // pred_fallthru
      _
    // Predicated region
    $region50: #{tpu_custom_call.1} parent=1 // pred_check
      _
    $region51: #{tpu_custom_call.1} parent=1 // pred_check_branch
      %117 = sbr.rel (0) target = $region53
    $region52: #{tpu_custom_call.1} parent=1 // pred_region
      %118 = dma.done [#allocation6], 1024
    $region53: #{tpu_custom_call.1} parent=1 // pred_fallthru
      _
    // Predicated region
    $region54: #{tpu_custom_call.1} parent=1 // pred_check
      _
    $region55: #{tpu_custom_call.1} parent=1 // pred_check_branch
      %120 = sbr.rel (0) target = $region57
    $region56: #{tpu_custom_call.1} parent=1 // pred_region
      %121 = dma.done [#allocation9], 1024
    $region57: #{tpu_custom_call.1} parent=1 // pred_fallthru
      _
    // Predicated region
    $region58: #{tpu_custom_call.1} parent=1 // pred_check
      _
    $region59: #{tpu_custom_call.1} parent=1 // pred_check_branch
      %123 = sbr.rel (0) target = $region61
    $region60: #{tpu_custom_call.1} parent=1 // pred_region
      %124 = dma.done [#allocation9], 4096
    $region61: #{tpu_custom_call.1} parent=1 // pred_fallthru
      _
    // Predicated region
    $region62: #{tpu_custom_call.1} parent=1 // pred_check
      _
    $region63: #{tpu_custom_call.1} parent=1 // pred_check_branch
      %126 = sbr.rel (0) target = $region65
    $region64: #{tpu_custom_call.1} parent=1 // pred_region
      %127 = dma.done [#allocation12], 1024
    $region65: #{tpu_custom_call.1} parent=1 // pred_fallthru
      _
    // Predicated region
    $region66: #{tpu_custom_call.1} parent=1 // pred_check
      _
    $region67: #{tpu_custom_call.1} parent=1 // pred_check_branch
      %129 = sbr.rel (0) target = $region69
    $region68: #{tpu_custom_call.1} parent=1 // pred_region
      %130 = dma.done [#allocation12], 1024
    $region69: #{tpu_custom_call.1} parent=1 // pred_fallthru
      _
    %v132 = vld [vmem:[#allocation2] sm:$0xf]
    %v133 = vld [vmem:[#allocation2 + $0x4] sm:$0xf]
    %v134 = vld [vmem:[#allocation7] sm:$0xf]
    %v135 = vld [vmem:[#allocation7 + $0x4] sm:$0xf]
    %v136 = vld [vmem:[#allocation7 + $0x8] sm:$0xf]
    %v137 = vld [vmem:[#allocation7 + $0xc] sm:$0xf]
    %v138 = vld [vmem:[#allocation7 + $0x10] sm:$0xf]
    %v139 = vld [vmem:[#allocation7 + $0x14] sm:$0xf]
    %v140 = vld [vmem:[#allocation7 + $0x18] sm:$0xf]
    %v141 = vld [vmem:[#allocation7 + $0x1c] sm:$0xf]
    %v142 = vld [vmem:[#allocation7 + $0x20] sm:$0xf]
    %v143 = vld [vmem:[#allocation7 + $0x24] sm:$0xf]
    %v144 = vld [vmem:[#allocation7 + $0x28] sm:$0xf]
    %v145 = vld [vmem:[#allocation7 + $0x2c] sm:$0xf]
    %v146 = vld [vmem:[#allocation7 + $0x30] sm:$0xf]
    %v147 = vld [vmem:[#allocation7 + $0x34] sm:$0xf]
    %v148 = vld [vmem:[#allocation7 + $0x38] sm:$0xf]
    %v149 = vld [vmem:[#allocation7 + $0x3c] sm:$0xf]
    %v150 = vld [vmem:[%s3] sm:$0x1]
    %v152 = vlaneseq
    %v153 = vshrl.u32 %v152, 7
    %v154 = vsub.s32 0, %v153
    %v155 = vrot.slane %v150, %v154
    %v159 = vunpack.c.l.b16 %v132
    %v160 = vunpack.c.l.b16 %v133
    %v161 = vpack.c.b16 %v160, %v159
    %v179 = vunpack.c.l.b16 %v134
    %v180 = vunpack.c.l.b16 %v135
    %v181 = vunpack.c.l.b16 %v136
    %v182 = vunpack.c.l.b16 %v137
    %v183 = vunpack.c.l.b16 %v138
    %v184 = vunpack.c.l.b16 %v139
    %v185 = vunpack.c.l.b16 %v140
    %v186 = vunpack.c.l.b16 %v141
    %v187 = vunpack.c.l.b16 %v142
    %v188 = vunpack.c.l.b16 %v143
    %v189 = vunpack.c.l.b16 %v144
    %v190 = vunpack.c.l.b16 %v145
    %v191 = vunpack.c.l.b16 %v146
    %v192 = vunpack.c.l.b16 %v147
    %v193 = vunpack.c.l.b16 %v148
    %v194 = vunpack.c.l.b16 %v149
    %v195 = vpack.c.b16 %v180, %v179
    %v196 = vpack.c.b16 %v182, %v181
    %v197 = vpack.c.b16 %v184, %v183
    %v198 = vpack.c.b16 %v186, %v185
    %v199 = vpack.c.b16 %v188, %v187
    %v200 = vpack.c.b16 %v190, %v189
    %v201 = vpack.c.b16 %v192, %v191
    %v202 = vpack.c.b16 %v194, %v193
    %211 = vmatprep.subr.bf16.mxu0 0
    %212 = vmatpush1.bf16.msra.mxu0 %v195
    %213 = vmatprep.subr.bf16.mxu0 0
    %214 = vmatpush1.bf16.msra.mxu0 %v196
    %215 = vmatprep.subr.bf16.mxu0 0
    %216 = vmatpush1.bf16.msra.mxu0 %v197
    %217 = vmatprep.subr.bf16.mxu0 0
    %218 = vmatpush1.bf16.msra.mxu0 %v198
    %219 = vmatprep.subr.bf16.mxu0 0
    %220 = vmatpush1.bf16.msra.mxu0 %v199
    %221 = vmatprep.subr.bf16.mxu0 0
    %222 = vmatpush1.bf16.msra.mxu0 %v200
    %223 = vmatprep.subr.bf16.mxu0 0
    %224 = vmatpush1.bf16.msra.mxu0 %v201
    %225 = vmatprep.subr.bf16.mxu0 0
    %226 = vmatpush1.bf16.msra.mxu0 %v202
    %227 = vmatprep.subr.bf16.mxu0 0
    %228 = vmatpush1.bf16.msra.mxu0 0
    %229 = vmatprep.subr.bf16.mxu0 0
    %230 = vmatpush1.bf16.msra.mxu0 0
    %231 = vmatprep.subr.bf16.mxu0 0
    %232 = vmatpush1.bf16.msra.mxu0 0
    %233 = vmatprep.subr.bf16.mxu0 0
    %234 = vmatpush1.bf16.msra.mxu0 0
    %235 = vmatprep.subr.bf16.mxu0 0
    %236 = vmatpush1.bf16.msra.mxu0 0
    %237 = vmatprep.subr.bf16.mxu0 0
    %238 = vmatpush1.bf16.msra.mxu0 0
    %239 = vmatprep.subr.bf16.mxu0 0
    %240 = vmatpush1.bf16.msra.mxu0 0
    %241 = vmatprep.subr.bf16.mxu0 0
    %242 = vmatpush1.bf16.msra.mxu0 0
    %243 = vmatprep.mubr.bf16.mxu0 0
    %244 = vmatmul.mubr.bf16.gmra.mrb[0].mxu0 %v161
    %v245 = vpop.f32.mrb[0].mxu0
    %v246 = vadd.f32 %v155, %v245
    %v247 = vpop.f32.mrb[0].mxu0
    %v248 = vpop.f32.mrb[0].mxu0
    %v249 = vadd.f32 %v155, %v248
    %v250 = vpop.f32.mrb[0].mxu0
    %251 = vdwg.mxu0
    %v252 = vld [vmem:[#allocation5] sm:$0xf]
    %v253 = vld [vmem:[#allocation5 + $0x4] sm:$0xf]
    %v254 = vld [vmem:[#allocation8] sm:$0xf]
    %v255 = vld [vmem:[#allocation8 + $0x4] sm:$0xf]
    %v256 = vld [vmem:[#allocation8 + $0x8] sm:$0xf]
    %v257 = vld [vmem:[#allocation8 + $0xc] sm:$0xf]
    %v258 = vld [vmem:[#allocation8 + $0x10] sm:$0xf]
    %v259 = vld [vmem:[#allocation8 + $0x14] sm:$0xf]
    %v260 = vld [vmem:[#allocation8 + $0x18] sm:$0xf]
    %v261 = vld [vmem:[#allocation8 + $0x1c] sm:$0xf]
    %v262 = vld [vmem:[#allocation8 + $0x20] sm:$0xf]
    %v263 = vld [vmem:[#allocation8 + $0x24] sm:$0xf]
    %v264 = vld [vmem:[#allocation8 + $0x28] sm:$0xf]
    %v265 = vld [vmem:[#allocation8 + $0x2c] sm:$0xf]
    %v266 = vld [vmem:[#allocation8 + $0x30] sm:$0xf]
    %v267 = vld [vmem:[#allocation8 + $0x34] sm:$0xf]
    %v268 = vld [vmem:[#allocation8 + $0x38] sm:$0xf]
    %v269 = vld [vmem:[#allocation8 + $0x3c] sm:$0xf]
    %v270 = vld [vmem:[%s5] sm:$0x1]
    %v272 = vlaneseq
    %v273 = vshrl.u32 %v272, 7
    %v274 = vsub.s32 0, %v273
    %v275 = vrot.slane %v270, %v274
    %v279 = vunpack.c.l.b16 %v252
    %v280 = vunpack.c.l.b16 %v253
    %v281 = vpack.c.b16 %v280, %v279
    %v299 = vunpack.c.l.b16 %v254
    %v300 = vunpack.c.l.b16 %v255
    %v301 = vunpack.c.l.b16 %v256
    %v302 = vunpack.c.l.b16 %v257
    %v303 = vunpack.c.l.b16 %v258
    %v304 = vunpack.c.l.b16 %v259
    %v305 = vunpack.c.l.b16 %v260
    %v306 = vunpack.c.l.b16 %v261
    %v307 = vunpack.c.l.b16 %v262
    %v308 = vunpack.c.l.b16 %v263
    %v309 = vunpack.c.l.b16 %v264
    %v310 = vunpack.c.l.b16 %v265
    %v311 = vunpack.c.l.b16 %v266
    %v312 = vunpack.c.l.b16 %v267
    %v313 = vunpack.c.l.b16 %v268
    %v314 = vunpack.c.l.b16 %v269
    %v315 = vpack.c.b16 %v300, %v299
    %v316 = vpack.c.b16 %v302, %v301
    %v317 = vpack.c.b16 %v304, %v303
    %v318 = vpack.c.b16 %v306, %v305
    %v319 = vpack.c.b16 %v308, %v307
    %v320 = vpack.c.b16 %v310, %v309
    %v321 = vpack.c.b16 %v312, %v311
    %v322 = vpack.c.b16 %v314, %v313
    %331 = vmatprep.subr.bf16.mxu0 0
    %332 = vmatpush1.bf16.msra.mxu0 %v315
    %333 = vmatprep.subr.bf16.mxu0 0
    %334 = vmatpush1.bf16.msra.mxu0 %v316
    %335 = vmatprep.subr.bf16.mxu0 0
    %336 = vmatpush1.bf16.msra.mxu0 %v317
    %337 = vmatprep.subr.bf16.mxu0 0
    %338 = vmatpush1.bf16.msra.mxu0 %v318
    %339 = vmatprep.subr.bf16.mxu0 0
    %340 = vmatpush1.bf16.msra.mxu0 %v319
    %341 = vmatprep.subr.bf16.mxu0 0
    %342 = vmatpush1.bf16.msra.mxu0 %v320
    %343 = vmatprep.subr.bf16.mxu0 0
    %344 = vmatpush1.bf16.msra.mxu0 %v321
    %345 = vmatprep.subr.bf16.mxu0 0
    %346 = vmatpush1.bf16.msra.mxu0 %v322
    %347 = vmatprep.subr.bf16.mxu0 0
    %348 = vmatpush1.bf16.msra.mxu0 0
    %349 = vmatprep.subr.bf16.mxu0 0
    %350 = vmatpush1.bf16.msra.mxu0 0
    %351 = vmatprep.subr.bf16.mxu0 0
    %352 = vmatpush1.bf16.msra.mxu0 0
    %353 = vmatprep.subr.bf16.mxu0 0
    %354 = vmatpush1.bf16.msra.mxu0 0
    %355 = vmatprep.subr.bf16.mxu0 0
    %356 = vmatpush1.bf16.msra.mxu0 0
    %357 = vmatprep.subr.bf16.mxu0 0
    %358 = vmatpush1.bf16.msra.mxu0 0
    %359 = vmatprep.subr.bf16.mxu0 0
    %360 = vmatpush1.bf16.msra.mxu0 0
    %361 = vmatprep.subr.bf16.mxu0 0
    %362 = vmatpush1.bf16.msra.mxu0 0
    %363 = vmatprep.mubr.bf16.mxu0 0
    %364 = vmatmul.mubr.bf16.gmra.mrb[0].mxu0 %v281
    %v365 = vpop.f32.mrb[0].mxu0
    %v366 = vadd.f32 %v275, %v365
    %v367 = vpop.f32.mrb[0].mxu0
    %v368 = vpop.f32.mrb[0].mxu0
    %v369 = vadd.f32 %v275, %v368
    %v370 = vpop.f32.mrb[0].mxu0
    %371 = vdwg.mxu0
    %v372 = vpack.c.bf16 %v249, %v246
    %v373 = vpack.c.bf16 %v369, %v366
    %v374 = vld [vmem:[#allocation10] sm:$0xf]
    %v375 = vld [vmem:[#allocation10 + $0x4] sm:$0xf]
    %v376 = vld [vmem:[#allocation10 + $0x8] sm:$0xf]
    %v377 = vld [vmem:[#allocation10 + $0xc] sm:$0xf]
    %v378 = vld [vmem:[#allocation10 + $0x10] sm:$0xf]
    %v379 = vld [vmem:[#allocation10 + $0x14] sm:$0xf]
    %v380 = vld [vmem:[#allocation10 + $0x18] sm:$0xf]
    %v381 = vld [vmem:[#allocation10 + $0x1c] sm:$0xf]
    %v382 = vld [vmem:[#allocation10 + $0x20] sm:$0xf]
    %v383 = vld [vmem:[#allocation10 + $0x24] sm:$0xf]
    %v384 = vld [vmem:[#allocation10 + $0x28] sm:$0xf]
    %v385 = vld [vmem:[#allocation10 + $0x2c] sm:$0xf]
    %v386 = vld [vmem:[#allocation10 + $0x30] sm:$0xf]
    %v387 = vld [vmem:[#allocation10 + $0x34] sm:$0xf]
    %v388 = vld [vmem:[#allocation10 + $0x38] sm:$0xf]
    %v389 = vld [vmem:[#allocation10 + $0x3c] sm:$0xf]
    %v406 = vunpack.c.l.b16 %v374
    %v407 = vunpack.c.l.b16 %v375
    %v408 = vunpack.c.l.b16 %v376
    %v409 = vunpack.c.l.b16 %v377
    %v410 = vunpack.c.l.b16 %v378
    %v411 = vunpack.c.l.b16 %v379
    %v412 = vunpack.c.l.b16 %v380
    %v413 = vunpack.c.l.b16 %v381
    %v414 = vunpack.c.l.b16 %v382
    %v415 = vunpack.c.l.b16 %v383
    %v416 = vunpack.c.l.b16 %v384
    %v417 = vunpack.c.l.b16 %v385
    %v418 = vunpack.c.l.b16 %v386
    %v419 = vunpack.c.l.b16 %v387
    %v420 = vunpack.c.l.b16 %v388
    %v421 = vunpack.c.l.b16 %v389
    %v422 = vpack.c.b16 %v407, %v406
    %v423 = vpack.c.b16 %v409, %v408
    %v424 = vpack.c.b16 %v411, %v410
    %v425 = vpack.c.b16 %v413, %v412
    %v426 = vpack.c.b16 %v415, %v414
    %v427 = vpack.c.b16 %v417, %v416
    %v428 = vpack.c.b16 %v419, %v418
    %v429 = vpack.c.b16 %v421, %v420
    %438 = vmatprep.subr.bf16.mxu0 0
    %439 = vmatpush1.bf16.msra.mxu0 %v422
    %440 = vmatprep.subr.bf16.mxu0 0
    %441 = vmatpush1.bf16.msra.mxu0 %v423
    %442 = vmatprep.subr.bf16.mxu0 0
    %443 = vmatpush1.bf16.msra.mxu0 %v424
    %444 = vmatprep.subr.bf16.mxu0 0
    %445 = vmatpush1.bf16.msra.mxu0 %v425
    %446 = vmatprep.subr.bf16.mxu0 0
    %447 = vmatpush1.bf16.msra.mxu0 %v426
    %448 = vmatprep.subr.bf16.mxu0 0
    %449 = vmatpush1.bf16.msra.mxu0 %v427
    %450 = vmatprep.subr.bf16.mxu0 0
    %451 = vmatpush1.bf16.msra.mxu0 %v428
    %452 = vmatprep.subr.bf16.mxu0 0
    %453 = vmatpush1.bf16.msra.mxu0 %v429
    %454 = vmatprep.subr.bf16.mxu0 0
    %455 = vmatpush1.bf16.msra.mxu0 0
    %456 = vmatprep.subr.bf16.mxu0 0
    %457 = vmatpush1.bf16.msra.mxu0 0
    %458 = vmatprep.subr.bf16.mxu0 0
    %459 = vmatpush1.bf16.msra.mxu0 0
    %460 = vmatprep.subr.bf16.mxu0 0
    %461 = vmatpush1.bf16.msra.mxu0 0
    %462 = vmatprep.subr.bf16.mxu0 0
    %463 = vmatpush1.bf16.msra.mxu0 0
    %464 = vmatprep.subr.bf16.mxu0 0
    %465 = vmatpush1.bf16.msra.mxu0 0
    %466 = vmatprep.subr.bf16.mxu0 0
    %467 = vmatpush1.bf16.msra.mxu0 0
    %468 = vmatprep.subr.bf16.mxu0 0
    %469 = vmatpush1.bf16.msra.mxu0 0
    %470 = vmatprep.mubr.bf16.mxu0 0
    %471 = vmatmul.mubr.bf16.gmra.mrb[0].mxu0 %v372
    %v472 = vpop.f32.mrb[0].mxu0
    %v473 = vadd.f32 0.0, %v472
    %v474 = vpop.f32.mrb[0].mxu0
    %v475 = vpop.f32.mrb[0].mxu0
    %v476 = vadd.f32 0.0, %v475
    %v477 = vpop.f32.mrb[0].mxu0
    %478 = vdwg.mxu0
    %v479 = vmul.f32 %v473, %v366
    %v480 = vmul.f32 %v476, %v369
    %481 = vadd.xlane.f32.xlu0 %v479
    %v482 = vpop.xlane.xlu0 %481
    %483 = vadd.xlane.f32.xlu0 %v480
    %v484 = vpop.xlane.xlu0 %483
    %s485 = scalar_lea.vmem [#allocation10], 64
    %v486 = vld [vmem:[%s485] sm:$0xf]
    %v487 = vld [vmem:[%s485 + $0x4] sm:$0xf]
    %v488 = vld [vmem:[%s485 + $0x8] sm:$0xf]
    %v489 = vld [vmem:[%s485 + $0xc] sm:$0xf]
    %v490 = vld [vmem:[%s485 + $0x10] sm:$0xf]
    %v491 = vld [vmem:[%s485 + $0x14] sm:$0xf]
    %v492 = vld [vmem:[%s485 + $0x18] sm:$0xf]
    %v493 = vld [vmem:[%s485 + $0x1c] sm:$0xf]
    %v494 = vld [vmem:[%s485 + $0x20] sm:$0xf]
    %v495 = vld [vmem:[%s485 + $0x24] sm:$0xf]
    %v496 = vld [vmem:[%s485 + $0x28] sm:$0xf]
    %v497 = vld [vmem:[%s485 + $0x2c] sm:$0xf]
    %v498 = vld [vmem:[%s485 + $0x30] sm:$0xf]
    %v499 = vld [vmem:[%s485 + $0x34] sm:$0xf]
    %v500 = vld [vmem:[%s485 + $0x38] sm:$0xf]
    %v501 = vld [vmem:[%s485 + $0x3c] sm:$0xf]
    %v518 = vunpack.c.l.b16 %v486
    %v519 = vunpack.c.l.b16 %v487
    %v520 = vunpack.c.l.b16 %v488
    %v521 = vunpack.c.l.b16 %v489
    %v522 = vunpack.c.l.b16 %v490
    %v523 = vunpack.c.l.b16 %v491
    %v524 = vunpack.c.l.b16 %v492
    %v525 = vunpack.c.l.b16 %v493
    %v526 = vunpack.c.l.b16 %v494
    %v527 = vunpack.c.l.b16 %v495
    %v528 = vunpack.c.l.b16 %v496
    %v529 = vunpack.c.l.b16 %v497
    %v530 = vunpack.c.l.b16 %v498
    %v531 = vunpack.c.l.b16 %v499
    %v532 = vunpack.c.l.b16 %v500
    %v533 = vunpack.c.l.b16 %v501
    %v534 = vpack.c.b16 %v519, %v518
    %v535 = vpack.c.b16 %v521, %v520
    %v536 = vpack.c.b16 %v523, %v522
    %v537 = vpack.c.b16 %v525, %v524
    %v538 = vpack.c.b16 %v527, %v526
    %v539 = vpack.c.b16 %v529, %v528
    %v540 = vpack.c.b16 %v531, %v530
    %v541 = vpack.c.b16 %v533, %v532
    %550 = vmatprep.subr.bf16.mxu0 0
    %551 = vmatpush1.bf16.msra.mxu0 %v534
    %552 = vmatprep.subr.bf16.mxu0 0
    %553 = vmatpush1.bf16.msra.mxu0 %v535
    %554 = vmatprep.subr.bf16.mxu0 0
    %555 = vmatpush1.bf16.msra.mxu0 %v536
    %556 = vmatprep.subr.bf16.mxu0 0
    %557 = vmatpush1.bf16.msra.mxu0 %v537
    %558 = vmatprep.subr.bf16.mxu0 0
    %559 = vmatpush1.bf16.msra.mxu0 %v538
    %560 = vmatprep.subr.bf16.mxu0 0
    %561 = vmatpush1.bf16.msra.mxu0 %v539
    %562 = vmatprep.subr.bf16.mxu0 0
    %563 = vmatpush1.bf16.msra.mxu0 %v540
    %564 = vmatprep.subr.bf16.mxu0 0
    %565 = vmatpush1.bf16.msra.mxu0 %v541
    %566 = vmatprep.subr.bf16.mxu0 0
    %567 = vmatpush1.bf16.msra.mxu0 0
    %568 = vmatprep.subr.bf16.mxu0 0
    %569 = vmatpush1.bf16.msra.mxu0 0
    %570 = vmatprep.subr.bf16.mxu0 0
    %571 = vmatpush1.bf16.msra.mxu0 0
    %572 = vmatprep.subr.bf16.mxu0 0
    %573 = vmatpush1.bf16.msra.mxu0 0
    %574 = vmatprep.subr.bf16.mxu0 0
    %575 = vmatpush1.bf16.msra.mxu0 0
    %576 = vmatprep.subr.bf16.mxu0 0
    %577 = vmatpush1.bf16.msra.mxu0 0
    %578 = vmatprep.subr.bf16.mxu0 0
    %579 = vmatpush1.bf16.msra.mxu0 0
    %580 = vmatprep.subr.bf16.mxu0 0
    %581 = vmatpush1.bf16.msra.mxu0 0
    %582 = vmatprep.mubr.bf16.mxu0 0
    %583 = vmatmul.mubr.bf16.gmra.mrb[0].mxu0 %v372
    %v584 = vpop.f32.mrb[0].mxu0
    %v585 = vadd.f32 0.0, %v584
    %v586 = vpop.f32.mrb[0].mxu0
    %v587 = vpop.f32.mrb[0].mxu0
    %v588 = vadd.f32 0.0, %v587
    %v589 = vpop.f32.mrb[0].mxu0
    %590 = vdwg.mxu0
    %v591 = vmul.f32 %v585, %v366
    %v592 = vmul.f32 %v588, %v369
    %593 = vadd.xlane.f32.xlu0 %v591
    %v594 = vpop.xlane.xlu0 %593
    %595 = vadd.xlane.f32.xlu0 %v592
    %v596 = vpop.xlane.xlu0 %595
    %s597 = scalar_lea.vmem [#allocation10], 128
    %v598 = vld [vmem:[%s597] sm:$0xf]
    %v599 = vld [vmem:[%s597 + $0x4] sm:$0xf]
    %v600 = vld [vmem:[%s597 + $0x8] sm:$0xf]
    %v601 = vld [vmem:[%s597 + $0xc] sm:$0xf]
    %v602 = vld [vmem:[%s597 + $0x10] sm:$0xf]
    %v603 = vld [vmem:[%s597 + $0x14] sm:$0xf]
    %v604 = vld [vmem:[%s597 + $0x18] sm:$0xf]
    %v605 = vld [vmem:[%s597 + $0x1c] sm:$0xf]
    %v606 = vld [vmem:[%s597 + $0x20] sm:$0xf]
    %v607 = vld [vmem:[%s597 + $0x24] sm:$0xf]
    %v608 = vld [vmem:[%s597 + $0x28] sm:$0xf]
    %v609 = vld [vmem:[%s597 + $0x2c] sm:$0xf]
    %v610 = vld [vmem:[%s597 + $0x30] sm:$0xf]
    %v611 = vld [vmem:[%s597 + $0x34] sm:$0xf]
    %v612 = vld [vmem:[%s597 + $0x38] sm:$0xf]
    %v613 = vld [vmem:[%s597 + $0x3c] sm:$0xf]
    %v630 = vunpack.c.l.b16 %v598
    %v631 = vunpack.c.l.b16 %v599
    %v632 = vunpack.c.l.b16 %v600
    %v633 = vunpack.c.l.b16 %v601
    %v634 = vunpack.c.l.b16 %v602
    %v635 = vunpack.c.l.b16 %v603
    %v636 = vunpack.c.l.b16 %v604
    %v637 = vunpack.c.l.b16 %v605
    %v638 = vunpack.c.l.b16 %v606
    %v639 = vunpack.c.l.b16 %v607
    %v640 = vunpack.c.l.b16 %v608
    %v641 = vunpack.c.l.b16 %v609
    %v642 = vunpack.c.l.b16 %v610
    %v643 = vunpack.c.l.b16 %v611
    %v644 = vunpack.c.l.b16 %v612
    %v645 = vunpack.c.l.b16 %v613
    %v646 = vpack.c.b16 %v631, %v630
    %v647 = vpack.c.b16 %v633, %v632
    %v648 = vpack.c.b16 %v635, %v634
    %v649 = vpack.c.b16 %v637, %v636
    %v650 = vpack.c.b16 %v639, %v638
    %v651 = vpack.c.b16 %v641, %v640
    %v652 = vpack.c.b16 %v643, %v642
    %v653 = vpack.c.b16 %v645, %v644
    %662 = vmatprep.subr.bf16.mxu0 0
    %663 = vmatpush1.bf16.msra.mxu0 %v646
    %664 = vmatprep.subr.bf16.mxu0 0
    %665 = vmatpush1.bf16.msra.mxu0 %v647
    %666 = vmatprep.subr.bf16.mxu0 0
    %667 = vmatpush1.bf16.msra.mxu0 %v648
    %668 = vmatprep.subr.bf16.mxu0 0
    %669 = vmatpush1.bf16.msra.mxu0 %v649
    %670 = vmatprep.subr.bf16.mxu0 0
    %671 = vmatpush1.bf16.msra.mxu0 %v650
    %672 = vmatprep.subr.bf16.mxu0 0
    %673 = vmatpush1.bf16.msra.mxu0 %v651
    %674 = vmatprep.subr.bf16.mxu0 0
    %675 = vmatpush1.bf16.msra.mxu0 %v652
    %676 = vmatprep.subr.bf16.mxu0 0
    %677 = vmatpush1.bf16.msra.mxu0 %v653
    %678 = vmatprep.subr.bf16.mxu0 0
    %679 = vmatpush1.bf16.msra.mxu0 0
    %680 = vmatprep.subr.bf16.mxu0 0
    %681 = vmatpush1.bf16.msra.mxu0 0
    %682 = vmatprep.subr.bf16.mxu0 0
    %683 = vmatpush1.bf16.msra.mxu0 0
    %684 = vmatprep.subr.bf16.mxu0 0
    %685 = vmatpush1.bf16.msra.mxu0 0
    %686 = vmatprep.subr.bf16.mxu0 0
    %687 = vmatpush1.bf16.msra.mxu0 0
    %688 = vmatprep.subr.bf16.mxu0 0
    %689 = vmatpush1.bf16.msra.mxu0 0
    %690 = vmatprep.subr.bf16.mxu0 0
    %691 = vmatpush1.bf16.msra.mxu0 0
    %692 = vmatprep.subr.bf16.mxu0 0
    %693 = vmatpush1.bf16.msra.mxu0 0
    %694 = vmatprep.mubr.bf16.mxu0 0
    %695 = vmatmul.mubr.bf16.gmra.mrb[0].mxu0 %v372
    %v696 = vpop.f32.mrb[0].mxu0
    %v697 = vadd.f32 0.0, %v696
    %v698 = vpop.f32.mrb[0].mxu0
    %v699 = vpop.f32.mrb[0].mxu0
    %v700 = vadd.f32 0.0, %v699
    %v701 = vpop.f32.mrb[0].mxu0
    %702 = vdwg.mxu0
    %v703 = vmul.f32 %v697, %v366
    %v704 = vmul.f32 %v700, %v369
    %705 = vadd.xlane.f32.xlu0 %v703
    %v706 = vpop.xlane.xlu0 %705
    %707 = vadd.xlane.f32.xlu0 %v704
    %v708 = vpop.xlane.xlu0 %707
    %s709 = scalar_lea.vmem [#allocation10], 192
    %v710 = vld [vmem:[%s709] sm:$0xf]
    %v711 = vld [vmem:[%s709 + $0x4] sm:$0xf]
    %v712 = vld [vmem:[%s709 + $0x8] sm:$0xf]
    %v713 = vld [vmem:[%s709 + $0xc] sm:$0xf]
    %v714 = vld [vmem:[%s709 + $0x10] sm:$0xf]
    %v715 = vld [vmem:[%s709 + $0x14] sm:$0xf]
    %v716 = vld [vmem:[%s709 + $0x18] sm:$0xf]
    %v717 = vld [vmem:[%s709 + $0x1c] sm:$0xf]
    %v718 = vld [vmem:[%s709 + $0x20] sm:$0xf]
    %v719 = vld [vmem:[%s709 + $0x24] sm:$0xf]
    %v720 = vld [vmem:[%s709 + $0x28] sm:$0xf]
    %v721 = vld [vmem:[%s709 + $0x2c] sm:$0xf]
    %v722 = vld [vmem:[%s709 + $0x30] sm:$0xf]
    %v723 = vld [vmem:[%s709 + $0x34] sm:$0xf]
    %v724 = vld [vmem:[%s709 + $0x38] sm:$0xf]
    %v725 = vld [vmem:[%s709 + $0x3c] sm:$0xf]
    %v742 = vunpack.c.l.b16 %v710
    %v743 = vunpack.c.l.b16 %v711
    %v744 = vunpack.c.l.b16 %v712
    %v745 = vunpack.c.l.b16 %v713
    %v746 = vunpack.c.l.b16 %v714
    %v747 = vunpack.c.l.b16 %v715
    %v748 = vunpack.c.l.b16 %v716
    %v749 = vunpack.c.l.b16 %v717
    %v750 = vunpack.c.l.b16 %v718
    %v751 = vunpack.c.l.b16 %v719
    %v752 = vunpack.c.l.b16 %v720
    %v753 = vunpack.c.l.b16 %v721
    %v754 = vunpack.c.l.b16 %v722
    %v755 = vunpack.c.l.b16 %v723
    %v756 = vunpack.c.l.b16 %v724
    %v757 = vunpack.c.l.b16 %v725
    %v758 = vpack.c.b16 %v743, %v742
    %v759 = vpack.c.b16 %v745, %v744
    %v760 = vpack.c.b16 %v747, %v746
    %v761 = vpack.c.b16 %v749, %v748
    %v762 = vpack.c.b16 %v751, %v750
    %v763 = vpack.c.b16 %v753, %v752
    %v764 = vpack.c.b16 %v755, %v754
    %v765 = vpack.c.b16 %v757, %v756
    %774 = vmatprep.subr.bf16.mxu0 0
    %775 = vmatpush1.bf16.msra.mxu0 %v758
    %776 = vmatprep.subr.bf16.mxu0 0
    %777 = vmatpush1.bf16.msra.mxu0 %v759
    %778 = vmatprep.subr.bf16.mxu0 0
    %779 = vmatpush1.bf16.msra.mxu0 %v760
    %780 = vmatprep.subr.bf16.mxu0 0
    %781 = vmatpush1.bf16.msra.mxu0 %v761
    %782 = vmatprep.subr.bf16.mxu0 0
    %783 = vmatpush1.bf16.msra.mxu0 %v762
    %784 = vmatprep.subr.bf16.mxu0 0
    %785 = vmatpush1.bf16.msra.mxu0 %v763
    %786 = vmatprep.subr.bf16.mxu0 0
    %787 = vmatpush1.bf16.msra.mxu0 %v764
    %788 = vmatprep.subr.bf16.mxu0 0
    %789 = vmatpush1.bf16.msra.mxu0 %v765
    %790 = vmatprep.subr.bf16.mxu0 0
    %791 = vmatpush1.bf16.msra.mxu0 0
    %792 = vmatprep.subr.bf16.mxu0 0
    %793 = vmatpush1.bf16.msra.mxu0 0
    %794 = vmatprep.subr.bf16.mxu0 0
    %795 = vmatpush1.bf16.msra.mxu0 0
    %796 = vmatprep.subr.bf16.mxu0 0
    %797 = vmatpush1.bf16.msra.mxu0 0
    %798 = vmatprep.subr.bf16.mxu0 0
    %799 = vmatpush1.bf16.msra.mxu0 0
    %800 = vmatprep.subr.bf16.mxu0 0
    %801 = vmatpush1.bf16.msra.mxu0 0
    %802 = vmatprep.subr.bf16.mxu0 0
    %803 = vmatpush1.bf16.msra.mxu0 0
    %804 = vmatprep.subr.bf16.mxu0 0
    %805 = vmatpush1.bf16.msra.mxu0 0
    %806 = vmatprep.mubr.bf16.mxu0 0
    %807 = vmatmul.mubr.bf16.gmra.mrb[0].mxu0 %v372
    %v808 = vpop.f32.mrb[0].mxu0
    %v809 = vadd.f32 0.0, %v808
    %v810 = vpop.f32.mrb[0].mxu0
    %v811 = vpop.f32.mrb[0].mxu0
    %v812 = vadd.f32 0.0, %v811
    %v813 = vpop.f32.mrb[0].mxu0
    %814 = vdwg.mxu0
    %v815 = vmul.f32 %v809, %v366
    %v816 = vmul.f32 %v812, %v369
    %817 = vadd.xlane.f32.xlu0 %v815
    %v818 = vpop.xlane.xlu0 %817
    %819 = vadd.xlane.f32.xlu0 %v816
    %v820 = vpop.xlane.xlu0 %819
    %vm821 = vcmask 7168
    %v822 = vsel %vm821, %v482, %v594
    %v823 = vsel %vm821, %v484, %v596
    %vm824 = vcmask 15360
    %v825 = vsel %vm824, %v822, %v706
    %v826 = vsel %vm824, %v823, %v708
    %vm827 = vcmask 23552
    %v828 = vsel %vm827, %v825, %v818
    %v829 = vsel %vm827, %v826, %v820
    %vm830 = vcmask 31744
    %v831 = vsel %vm830, %v828, 0.0
    %v832 = vsel %vm830, %v829, 0.0
    %v833 = vld [vmem:[#allocation11] sm:$0xf]
    %v834 = vld [vmem:[#allocation11 + $0x4] sm:$0xf]
    %v835 = vld [vmem:[#allocation11 + $0x8] sm:$0xf]
    %v836 = vld [vmem:[#allocation11 + $0xc] sm:$0xf]
    %v837 = vld [vmem:[#allocation11 + $0x10] sm:$0xf]
    %v838 = vld [vmem:[#allocation11 + $0x14] sm:$0xf]
    %v839 = vld [vmem:[#allocation11 + $0x18] sm:$0xf]
    %v840 = vld [vmem:[#allocation11 + $0x1c] sm:$0xf]
    %v841 = vld [vmem:[#allocation11 + $0x20] sm:$0xf]
    %v842 = vld [vmem:[#allocation11 + $0x24] sm:$0xf]
    %v843 = vld [vmem:[#allocation11 + $0x28] sm:$0xf]
    %v844 = vld [vmem:[#allocation11 + $0x2c] sm:$0xf]
    %v845 = vld [vmem:[#allocation11 + $0x30] sm:$0xf]
    %v846 = vld [vmem:[#allocation11 + $0x34] sm:$0xf]
    %v847 = vld [vmem:[#allocation11 + $0x38] sm:$0xf]
    %v848 = vld [vmem:[#allocation11 + $0x3c] sm:$0xf]
    %v849 = vld [vmem:[#allocation13] sm:$0xf]
    %v850 = vld [vmem:[#allocation13 + $0x4] sm:$0xf]
    %v851 = vld [vmem:[#allocation13 + $0x8] sm:$0xf]
    %v852 = vld [vmem:[#allocation13 + $0xc] sm:$0xf]
    %v853 = vld [vmem:[#allocation13 + $0x10] sm:$0xf]
    %v854 = vld [vmem:[#allocation13 + $0x14] sm:$0xf]
    %v855 = vld [vmem:[#allocation13 + $0x18] sm:$0xf]
    %v856 = vld [vmem:[#allocation13 + $0x1c] sm:$0xf]
    %v857 = vld [vmem:[#allocation13 + $0x20] sm:$0xf]
    %v858 = vld [vmem:[#allocation13 + $0x24] sm:$0xf]
    %v859 = vld [vmem:[#allocation13 + $0x28] sm:$0xf]
    %v860 = vld [vmem:[#allocation13 + $0x2c] sm:$0xf]
    %v861 = vld [vmem:[#allocation13 + $0x30] sm:$0xf]
    %v862 = vld [vmem:[#allocation13 + $0x34] sm:$0xf]
    %v863 = vld [vmem:[#allocation13 + $0x38] sm:$0xf]
    %v864 = vld [vmem:[#allocation13 + $0x3c] sm:$0xf]
    %v881 = vunpack.c.l.b16 %v849
    %v882 = vunpack.c.l.b16 %v850
    %v883 = vunpack.c.l.b16 %v851
    %v884 = vunpack.c.l.b16 %v852
    %v885 = vunpack.c.l.b16 %v853
    %v886 = vunpack.c.l.b16 %v854
    %v887 = vunpack.c.l.b16 %v855
    %v888 = vunpack.c.l.b16 %v856
    %v889 = vunpack.c.l.b16 %v857
    %v890 = vunpack.c.l.b16 %v858
    %v891 = vunpack.c.l.b16 %v859
    %v892 = vunpack.c.l.b16 %v860
    %v893 = vunpack.c.l.b16 %v861
    %v894 = vunpack.c.l.b16 %v862
    %v895 = vunpack.c.l.b16 %v863
    %v896 = vunpack.c.l.b16 %v864
    %v897 = vpack.c.b16 %v882, %v881
    %v898 = vpack.c.b16 %v884, %v883
    %v899 = vpack.c.b16 %v886, %v885
    %v900 = vpack.c.b16 %v888, %v887
    %v901 = vpack.c.b16 %v890, %v889
    %v902 = vpack.c.b16 %v892, %v891
    %v903 = vpack.c.b16 %v894, %v893
    %v904 = vpack.c.b16 %v896, %v895
    %913 = vmatprep.subr.bf16.mxu0 0
    %914 = vmatpush1.bf16.msra.mxu0 %v897
    %915 = vmatprep.subr.bf16.mxu0 0
    %916 = vmatpush1.bf16.msra.mxu0 %v898
    %917 = vmatprep.subr.bf16.mxu0 0
    %918 = vmatpush1.bf16.msra.mxu0 %v899
    %919 = vmatprep.subr.bf16.mxu0 0
    %920 = vmatpush1.bf16.msra.mxu0 %v900
    %921 = vmatprep.subr.bf16.mxu0 0
    %922 = vmatpush1.bf16.msra.mxu0 %v901
    %923 = vmatprep.subr.bf16.mxu0 0
    %924 = vmatpush1.bf16.msra.mxu0 %v902
    %925 = vmatprep.subr.bf16.mxu0 0
    %926 = vmatpush1.bf16.msra.mxu0 %v903
    %927 = vmatprep.subr.bf16.mxu0 0
    %928 = vmatpush1.bf16.msra.mxu0 %v904
    %929 = vmatprep.subr.bf16.mxu0 0
    %930 = vmatpush1.bf16.msra.mxu0 0
    %931 = vmatprep.subr.bf16.mxu0 0
    %932 = vmatpush1.bf16.msra.mxu0 0
    %933 = vmatprep.subr.bf16.mxu0 0
    %934 = vmatpush1.bf16.msra.mxu0 0
    %935 = vmatprep.subr.bf16.mxu0 0
    %936 = vmatpush1.bf16.msra.mxu0 0
    %937 = vmatprep.subr.bf16.mxu0 0
    %938 = vmatpush1.bf16.msra.mxu0 0
    %939 = vmatprep.subr.bf16.mxu0 0
    %940 = vmatpush1.bf16.msra.mxu0 0
    %941 = vmatprep.subr.bf16.mxu0 0
    %942 = vmatpush1.bf16.msra.mxu0 0
    %943 = vmatprep.subr.bf16.mxu0 0
    %944 = vmatpush1.bf16.msra.mxu0 0
    %945 = vmatprep.mubr.bf16.mxu0 0
    %946 = vmatmul.mubr.bf16.gmra.mrb[0].mxu0 %v373
    %v947 = vpop.f32.mrb[0].mxu0
    %v948 = vadd.f32 0.0, %v947
    %v949 = vpop.f32.mrb[0].mxu0
    %v950 = vpop.f32.mrb[0].mxu0
    %v951 = vadd.f32 0.0, %v950
    %v952 = vpop.f32.mrb[0].mxu0
    %953 = vdwg.mxu0
    %v970 = vunpack.c.l.b16 %v833
    %v971 = vunpack.c.l.b16 %v834
    %v972 = vunpack.c.l.b16 %v835
    %v973 = vunpack.c.l.b16 %v836
    %v974 = vunpack.c.l.b16 %v837
    %v975 = vunpack.c.l.b16 %v838
    %v976 = vunpack.c.l.b16 %v839
    %v977 = vunpack.c.l.b16 %v840
    %v978 = vunpack.c.l.b16 %v841
    %v979 = vunpack.c.l.b16 %v842
    %v980 = vunpack.c.l.b16 %v843
    %v981 = vunpack.c.l.b16 %v844
    %v982 = vunpack.c.l.b16 %v845
    %v983 = vunpack.c.l.b16 %v846
    %v984 = vunpack.c.l.b16 %v847
    %v985 = vunpack.c.l.b16 %v848
    %v986 = vpack.c.b16 %v971, %v970
    %v987 = vpack.c.b16 %v973, %v972
    %v988 = vpack.c.b16 %v975, %v974
    %v989 = vpack.c.b16 %v977, %v976
    %v990 = vpack.c.b16 %v979, %v978
    %v991 = vpack.c.b16 %v981, %v980
    %v992 = vpack.c.b16 %v983, %v982
    %v993 = vpack.c.b16 %v985, %v984
    %1002 = vmatprep.subr.bf16.mxu0 0
    %1003 = vmatpush1.bf16.msra.mxu0 %v986
    %1004 = vmatprep.subr.bf16.mxu0 0
    %1005 = vmatpush1.bf16.msra.mxu0 %v987
    %1006 = vmatprep.subr.bf16.mxu0 0
    %1007 = vmatpush1.bf16.msra.mxu0 %v988
    %1008 = vmatprep.subr.bf16.mxu0 0
    %1009 = vmatpush1.bf16.msra.mxu0 %v989
    %1010 = vmatprep.subr.bf16.mxu0 0
    %1011 = vmatpush1.bf16.msra.mxu0 %v990
    %1012 = vmatprep.subr.bf16.mxu0 0
    %1013 = vmatpush1.bf16.msra.mxu0 %v991
    %1014 = vmatprep.subr.bf16.mxu0 0
    %1015 = vmatpush1.bf16.msra.mxu0 %v992
    %1016 = vmatprep.subr.bf16.mxu0 0
    %1017 = vmatpush1.bf16.msra.mxu0 %v993
    %1018 = vmatprep.subr.bf16.mxu0 0
    %1019 = vmatpush1.bf16.msra.mxu0 0
    %1020 = vmatprep.subr.bf16.mxu0 0
    %1021 = vmatpush1.bf16.msra.mxu0 0
    %1022 = vmatprep.subr.bf16.mxu0 0
    %1023 = vmatpush1.bf16.msra.mxu0 0
    %1024 = vmatprep.subr.bf16.mxu0 0
    %1025 = vmatpush1.bf16.msra.mxu0 0
    %1026 = vmatprep.subr.bf16.mxu0 0
    %1027 = vmatpush1.bf16.msra.mxu0 0
    %1028 = vmatprep.subr.bf16.mxu0 0
    %1029 = vmatpush1.bf16.msra.mxu0 0
    %1030 = vmatprep.subr.bf16.mxu0 0
    %1031 = vmatpush1.bf16.msra.mxu0 0
    %1032 = vmatprep.subr.bf16.mxu0 0
    %1033 = vmatpush1.bf16.msra.mxu0 0
    %1034 = vmatprep.mubr.bf16.mxu0 0
    %1035 = vmatmul.mubr.bf16.gmra.mrb[0].mxu0 %v372
    %v1036 = vpop.f32.mrb[0].mxu0
    %v1037 = vadd.f32 %v948, %v1036
    %v1038 = vpop.f32.mrb[0].mxu0
    %v1039 = vpop.f32.mrb[0].mxu0
    %v1040 = vadd.f32 %v951, %v1039
    %v1041 = vpop.f32.mrb[0].mxu0
    %1042 = vdwg.mxu0
    %v1043 = vld [vmem:[%s9] sm:$0x1]
    %v1045 = vlaneseq
    %v1046 = vshrl.u32 %v1045, 7
    %v1047 = vsub.s32 0, %v1046
    %v1048 = vrot.slane %v1043, %v1047
    %v1050 = vadd.f32 %v1037, %v1048
    %v1051 = vadd.f32 %v1040, %v1048
    %v1052 = vadd.f32 %v831, %v1050
    %v1053 = vadd.f32 %v832, %v1051
    %1054 = vst [vmem:[#allocation14] sm:$0xff] %v1052
    %1055 = vst [vmem:[#allocation14 + $0x8] sm:$0xff] %v1053
    // Predicated region
    $region70: #{tpu_custom_call.1} parent=1 // pred_check
      _
    $region71: #{tpu_custom_call.1} parent=1 // pred_check_branch
      %1057 = sbr.rel (0) target = $region73
    $region72: #{tpu_custom_call.1} parent=1 // pred_region
      %s1059 = ssub.s32 256, 256
      %1060 = vsyncadd [#allocation4], %s1059
      %s1061 = sshll.u32 [#allocation14], 4
      %s1062 = int_to_ptr.vmem [resolvable:$true] %s1061
      %1067 = dma.vmem_to_hbm [thread:$0]  %s1062, 256, %s10, [#allocation4], 128, 128, 8
    $region73: #{tpu_custom_call.1} parent=1 // pred_fallthru
      _
    // Predicated region
    $region74: #{tpu_custom_call.1} parent=1 // pred_check
      _
    $region75: #{tpu_custom_call.1} parent=1 // pred_check_branch
      %1069 = sbr.rel (0) target = $region77
    $region76: #{tpu_custom_call.1} parent=1 // pred_region
      %1070 = dma.done [#allocation4], 256
    $region77: #{tpu_custom_call.1} parent=1 // pred_fallthru
      _
    %1071 = vsyncpa [#allocation3], 1
    %1072 = vsyncpa [#allocation6], 1
    %1073 = vsyncpa [#allocation9], 1
    %1074 = vsyncpa [#allocation12], 1
    %1075 = vsyncpa [#allocation4], 1

</llo_original>
